<compile_context>
chip_gen: v7x
topology: tpu7x:2x2x1
jax: 0.10.0
libtpu: 0.0.40
codegen_flags: <defaults>
</compile_context>

<pallas_src>
import functools
import math

import jax
import jax.numpy as jnp
from jax.experimental import pallas as pl
from jax.experimental.pallas import tpu as pltpu

_MM_DTYPE = jnp.bfloat16   # MXU operand dtype (fp32 accumulation everywhere)


def self_attention_kernel(x_ref, mask_ref,
                          wq_ref, bq_ref, wk_ref, bk_ref, wv_ref, bv_ref,
                          wd_ref, bd_ref, gamma_ref, beta_ref,
                          o_ref, *, num_heads, head_size, scale):
    mm_dtype = wq_ref.dtype

    x_f32 = x_ref[...].astype(jnp.float32)          # (S, D) — one batch element
    x_mm = x_f32.astype(mm_dtype)

    # --- Q / K / V projections: bf16 MXU matmuls, fp32 accumulation + bias ---
    q = jnp.dot(x_mm, wq_ref[...], preferred_element_type=jnp.float32) + bq_ref[...]
    k = jnp.dot(x_mm, wk_ref[...], preferred_element_type=jnp.float32) + bk_ref[...]
    v = jnp.dot(x_mm, wv_ref[...], preferred_element_type=jnp.float32) + bv_ref[...]

    q_mm = q.astype(mm_dtype)
    k_mm = k.astype(mm_dtype)
    v_mm = v.astype(mm_dtype)

    mask = mask_ref[...].astype(jnp.float32)         # (1, S) additive key mask

    # --- per-head scaled dot-product attention (heads are contiguous D-chunks) ---
    ctx_heads = []
    for h in range(num_heads):
        lo = h * head_size
        hi = lo + head_size
        qh = q_mm[:, lo:hi]                           # (S, dh)
        kh = k_mm[:, lo:hi]
        vh = v_mm[:, lo:hi]

        # scores = Q_h @ K_h^T / sqrt(dh) + mask
        s = jax.lax.dot_general(qh, kh, (((1,), (1,)), ((), ())),
                                preferred_element_type=jnp.float32)   # (S, S)
        s = s * scale + mask                          # (1, S) broadcasts over queries

        # numerically stable softmax in fp32
        m = jnp.max(s, axis=-1, keepdims=True)
        p = jnp.exp(s - m)
        l = jnp.sum(p, axis=-1, keepdims=True)
        probs = p / l
        # TODO(synk): training-mode attention-prob dropout not implemented (eval = identity).

        ctx_heads.append(
            jnp.dot(probs.astype(mm_dtype), vh, preferred_element_type=jnp.float32))

    context = jnp.concatenate(ctx_heads, axis=-1)     # (S, D) fp32

    # --- output dense ---
    hidden = jnp.dot(context.astype(mm_dtype), wd_ref[...],
                     preferred_element_type=jnp.float32) + bd_ref[...]
    # TODO(synk): training-mode hidden dropout not implemented (eval = identity).

    # --- residual + TF-style LayerNorm (biased variance, eps inside sqrt) ---
    y = hidden + x_f32
    u = jnp.mean(y, axis=-1, keepdims=True)
    var = jnp.mean((y - u) * (y - u), axis=-1, keepdims=True)
    yn = (y - u) * jax.lax.rsqrt(var + 1e-12)
    o_ref[...] = (gamma_ref[...] * yn + beta_ref[...]).astype(o_ref.dtype)


def self_attention_forward(x, attention_mask, params, *, num_heads):
    """x: (B, S, D) fp32; attention_mask: additive mask of shape (B, 1, 1, S)."""
    B, S, D = x.shape
    assert D % num_heads == 0
    head_size = D // num_heads
    wq, bq, wk, bk, wv, bv, wd, bd, gamma, beta = params

    # TODO(synk): only key-dimension masks (B, 1, 1, S) are supported in-kernel;
    # general (B, 1, S, S) masks would need a (S, S) mask tile per batch.
    mask = attention_mask.reshape(B, 1, S).astype(jnp.float32)

    # Weights stored/DMA'd as bf16 (halves resident VMEM, native MXU rate);
    # biases / LN params stay fp32.
    wq_c = wq.astype(_MM_DTYPE)
    wk_c = wk.astype(_MM_DTYPE)
    wv_c = wv.astype(_MM_DTYPE)
    wd_c = wd.astype(_MM_DTYPE)

    kernel = functools.partial(self_attention_kernel,
                               num_heads=num_heads,
                               head_size=head_size,
                               scale=1.0 / math.sqrt(head_size))

    resident = lambda b: (0, 0)   # weights / biases stay in VMEM across the grid

    out = pl.pallas_call(
        kernel,
        out_shape=jax.ShapeDtypeStruct((B, S, D), x.dtype),
        grid=(B,),
        in_specs=[
            pl.BlockSpec((None, S, D), lambda b: (b, 0, 0)),   # x       (per-batch tile)
            pl.BlockSpec((None, 1, S), lambda b: (b, 0, 0)),   # mask    (per-batch tile)
            pl.BlockSpec((D, D), resident),                    # Wq
            pl.BlockSpec((1, D), resident),                    # bq
            pl.BlockSpec((D, D), resident),                    # Wk
            pl.BlockSpec((1, D), resident),                    # bk
            pl.BlockSpec((D, D), resident),                    # Wv
            pl.BlockSpec((1, D), resident),                    # bv
            pl.BlockSpec((D, D), resident),                    # Wd
            pl.BlockSpec((1, D), resident),                    # bd
            pl.BlockSpec((1, D), resident),                    # gamma
            pl.BlockSpec((1, D), resident),                    # beta
        ],
        out_specs=pl.BlockSpec((None, S, D), lambda b: (b, 0, 0)),
        compiler_params=pltpu.CompilerParams(
            dimension_semantics=("parallel",),      # shard batch across TCs on v7x
            vmem_limit_bytes=48 << 20,
        ),
    )(x, mask,
      wq_c, bq.reshape(1, D), wk_c, bk.reshape(1, D), wv_c, bv.reshape(1, D),
      wd_c, bd.reshape(1, D), gamma.reshape(1, D), beta.reshape(1, D))

    return out


def init_params(key, emb_dim):
    """Deterministic init mimicking nn.Linear default (uniform +-1/sqrt(fan_in))."""
    keys = jax.random.split(key, 8)
    bound = 1.0 / math.sqrt(emb_dim)
    # Stored as (in_features, out_features) so the kernel does x @ W.
    wq = jax.random.uniform(keys[0], (emb_dim, emb_dim), jnp.float32, -bound, bound)
    bq = jax.random.uniform(keys[1], (emb_dim,), jnp.float32, -bound, bound)
    wk = jax.random.uniform(keys[2], (emb_dim, emb_dim), jnp.float32, -bound, bound)
    bk = jax.random.uniform(keys[3], (emb_dim,), jnp.float32, -bound, bound)
    wv = jax.random.uniform(keys[4], (emb_dim, emb_dim), jnp.float32, -bound, bound)
    bv = jax.random.uniform(keys[5], (emb_dim,), jnp.float32, -bound, bound)
    wd = jax.random.uniform(keys[6], (emb_dim, emb_dim), jnp.float32, -bound, bound)
    bd = jax.random.uniform(keys[7], (emb_dim,), jnp.float32, -bound, bound)
    gamma = jnp.ones((emb_dim,), jnp.float32)    # LayerNorm.weight
    beta = jnp.zeros((emb_dim,), jnp.float32)    # LayerNorm.bias
    return wq, bq, wk, bk, wv, bv, wd, bd, gamma, beta


def reference_forward(x, attention_mask, params, *, num_heads):
    """Pure-JAX fp32 reference matching the PyTorch module (eval mode)."""
    wq, bq, wk, bk, wv, bv, wd, bd, gamma, beta = params
    B, S, D = x.shape
    dh = D // num_heads

    def split_heads(t):                             # (B,S,D) -> (B,H,S,dh)
        return t.reshape(B, S, num_heads, dh).transpose(0, 2, 1, 3)

    q = split_heads(x @ wq + bq)
    k = split_heads(x @ wk + bk)
    v = split_heads(x @ wv + bv)
    scores = jnp.einsum('bhqd,bhkd->bhqk', q, k) / math.sqrt(dh)
    scores = scores + attention_mask                # (B,1,1,S) broadcasts
    probs = jax.nn.softmax(scores, axis=-1)
    ctx = jnp.einsum('bhqk,bhkd->bhqd', probs, v)
    ctx = ctx.transpose(0, 2, 1, 3).reshape(B, S, D)
    hidden = ctx @ wd + bd
    y = hidden + x
    u = jnp.mean(y, axis=-1, keepdims=True)
    s = jnp.mean((y - u) ** 2, axis=-1, keepdims=True)
    return gamma * ((y - u) / jnp.sqrt(s + 1e-12)) + beta


if __name__ == "__main__":
    B, S, D, H = 2, 8, 128, 4   # batch=2, seq=8, emb_dim=128 (lane-dense), 4 heads

    key = jax.random.PRNGKey(0)
    kx, kp = jax.random.split(key)
    x = jax.random.normal(kx, (B, S, D), jnp.float32)

    # BERT-style additive key-padding mask: last 2 key positions of batch 1 masked.
    keep = jnp.ones((B, S), jnp.float32).at[1, S - 2:].set(0.0)
    attention_mask = (1.0 - keep)[:, None, None, :] * -10000.0   # (B, 1, 1, S)

    params = init_params(kp, D)

    out = self_attention_forward(x, attention_mask, params, num_heads=H)
    out = jax.block_until_ready(out)

    ref = reference_forward(x, attention_mask, params, num_heads=H)
    assert out.shape == (B, S, D)
    max_err = float(jnp.max(jnp.abs(out - ref)))
    # bf16 MXU operands with fp32 accumulation -> loosened tolerance vs fp32 reference.
    assert jnp.allclose(out, ref, atol=2e-2, rtol=2e-2), f"mismatch vs reference (max abs err {max_err})"

    print("KERNEL_OK")
</pallas_src>

<mosaic_0001>
module attributes {stable_mosaic.version = 11 : i64} {
  func.func @self_attention_kernel(%arg0: i32, %arg1: memref<1x8x128xf32, #tpu.memory_space<vmem>>, %arg2: memref<1x1x8xf32, #tpu.memory_space<vmem>>, %arg3: memref<128x128xbf16, #tpu.memory_space<vmem>>, %arg4: memref<1x128xf32, #tpu.memory_space<vmem>>, %arg5: memref<128x128xbf16, #tpu.memory_space<vmem>>, %arg6: memref<1x128xf32, #tpu.memory_space<vmem>>, %arg7: memref<128x128xbf16, #tpu.memory_space<vmem>>, %arg8: memref<1x128xf32, #tpu.memory_space<vmem>>, %arg9: memref<128x128xbf16, #tpu.memory_space<vmem>>, %arg10: memref<1x128xf32, #tpu.memory_space<vmem>>, %arg11: memref<1x128xf32, #tpu.memory_space<vmem>>, %arg12: memref<1x128xf32, #tpu.memory_space<vmem>>, %arg13: memref<1x8x128xf32, #tpu.memory_space<vmem>>) attributes {dimension_semantics = [#tpu.dimension_semantics<parallel>], iteration_bounds = array<i64: 2>, scalar_prefetch = 0 : i64, scratch_operands = 0 : i64, tpu.core_type = #tpu.core_type<tc>, window_params = [{transform_indices = @transform_0, window_bounds = array<i64: 1, 8, 128>}, {transform_indices = @transform_1, window_bounds = array<i64: 1, 1, 8>}, {pipeline_mode = #tpu.pipeline_mode<synchronous>, transform_indices = @transform_2, window_bounds = array<i64: 128, 128>}, {pipeline_mode = #tpu.pipeline_mode<synchronous>, transform_indices = @transform_3, window_bounds = array<i64: 1, 128>}, {pipeline_mode = #tpu.pipeline_mode<synchronous>, transform_indices = @transform_4, window_bounds = array<i64: 128, 128>}, {pipeline_mode = #tpu.pipeline_mode<synchronous>, transform_indices = @transform_5, window_bounds = array<i64: 1, 128>}, {pipeline_mode = #tpu.pipeline_mode<synchronous>, transform_indices = @transform_6, window_bounds = array<i64: 128, 128>}, {pipeline_mode = #tpu.pipeline_mode<synchronous>, transform_indices = @transform_7, window_bounds = array<i64: 1, 128>}, {pipeline_mode = #tpu.pipeline_mode<synchronous>, transform_indices = @transform_8, window_bounds = array<i64: 128, 128>}, {pipeline_mode = #tpu.pipeline_mode<synchronous>, transform_indices = @transform_9, window_bounds = array<i64: 1, 128>}, {pipeline_mode = #tpu.pipeline_mode<synchronous>, transform_indices = @transform_10, window_bounds = array<i64: 1, 128>}, {pipeline_mode = #tpu.pipeline_mode<synchronous>, transform_indices = @transform_11, window_bounds = array<i64: 1, 128>}, {transform_indices = @transform_12, window_bounds = array<i64: 1, 8, 128>}]} {
    %c0 = arith.constant 0 : index
    %c0_0 = arith.constant 0 : index
    %c0_1 = arith.constant 0 : index
    %0 = vector.load %arg1[%c0, %c0_0, %c0_1] : memref<1x8x128xf32, #tpu.memory_space<vmem>>, vector<1x8x128xf32>
    %1 = vector.shape_cast %0 : vector<1x8x128xf32> to vector<8x128xf32>
    %2 = arith.truncf %1 : vector<8x128xf32> to vector<8x128xbf16>
    %c0_2 = arith.constant 0 : index
    %c0_3 = arith.constant 0 : index
    %3 = vector.load %arg3[%c0_2, %c0_3] : memref<128x128xbf16, #tpu.memory_space<vmem>>, vector<128x128xbf16>
    %cst = arith.constant dense<0.000000e+00> : vector<8x128xf32>
    %4 = tpu.matmul %2, %3, %cst {dimension_numbers = #tpu.dot_dimension_numbers<[1], [0], [0], [1], [0, 0, 1, 1], [], []>} : vector<8x128xbf16>, vector<128x128xbf16>, vector<8x128xf32> -> vector<8x128xf32>
    %c0_4 = arith.constant 0 : index
    %c0_5 = arith.constant 0 : index
    %5 = vector.load %arg4[%c0_4, %c0_5] : memref<1x128xf32, #tpu.memory_space<vmem>>, vector<1x128xf32>
    %6 = vector.broadcast %5 : vector<1x128xf32> to vector<8x128xf32>
    %7 = arith.addf %4, %6 : vector<8x128xf32>
    %c0_6 = arith.constant 0 : index
    %c0_7 = arith.constant 0 : index
    %8 = vector.load %arg5[%c0_6, %c0_7] : memref<128x128xbf16, #tpu.memory_space<vmem>>, vector<128x128xbf16>
    %cst_8 = arith.constant dense<0.000000e+00> : vector<8x128xf32>
    %9 = tpu.matmul %2, %8, %cst_8 {dimension_numbers = #tpu.dot_dimension_numbers<[1], [0], [0], [1], [0, 0, 1, 1], [], []>} : vector<8x128xbf16>, vector<128x128xbf16>, vector<8x128xf32> -> vector<8x128xf32>
    %c0_9 = arith.constant 0 : index
    %c0_10 = arith.constant 0 : index
    %10 = vector.load %arg6[%c0_9, %c0_10] : memref<1x128xf32, #tpu.memory_space<vmem>>, vector<1x128xf32>
    %11 = vector.broadcast %10 : vector<1x128xf32> to vector<8x128xf32>
    %12 = arith.addf %9, %11 : vector<8x128xf32>
    %c0_11 = arith.constant 0 : index
    %c0_12 = arith.constant 0 : index
    %13 = vector.load %arg7[%c0_11, %c0_12] : memref<128x128xbf16, #tpu.memory_space<vmem>>, vector<128x128xbf16>
    %cst_13 = arith.constant dense<0.000000e+00> : vector<8x128xf32>
    %14 = tpu.matmul %2, %13, %cst_13 {dimension_numbers = #tpu.dot_dimension_numbers<[1], [0], [0], [1], [0, 0, 1, 1], [], []>} : vector<8x128xbf16>, vector<128x128xbf16>, vector<8x128xf32> -> vector<8x128xf32>
    %c0_14 = arith.constant 0 : index
    %c0_15 = arith.constant 0 : index
    %15 = vector.load %arg8[%c0_14, %c0_15] : memref<1x128xf32, #tpu.memory_space<vmem>>, vector<1x128xf32>
    %16 = vector.broadcast %15 : vector<1x128xf32> to vector<8x128xf32>
    %17 = arith.addf %14, %16 : vector<8x128xf32>
    %18 = arith.truncf %7 : vector<8x128xf32> to vector<8x128xbf16>
    %19 = arith.truncf %12 : vector<8x128xf32> to vector<8x128xbf16>
    %20 = arith.truncf %17 : vector<8x128xf32> to vector<8x128xbf16>
    %c0_16 = arith.constant 0 : index
    %c0_17 = arith.constant 0 : index
    %c0_18 = arith.constant 0 : index
    %21 = vector.load %arg2[%c0_16, %c0_17, %c0_18] : memref<1x1x8xf32, #tpu.memory_space<vmem>>, vector<1x1x8xf32>
    %22 = vector.shape_cast %21 : vector<1x1x8xf32> to vector<1x8xf32>
    %23 = vector.extract_strided_slice %18 {offsets = [0, 0], sizes = [8, 32], strides = [1, 1]} : vector<8x128xbf16> to vector<8x32xbf16>
    %24 = vector.extract_strided_slice %19 {offsets = [0, 0], sizes = [8, 32], strides = [1, 1]} : vector<8x128xbf16> to vector<8x32xbf16>
    %25 = vector.extract_strided_slice %20 {offsets = [0, 0], sizes = [8, 32], strides = [1, 1]} : vector<8x128xbf16> to vector<8x32xbf16>
    %cst_19 = arith.constant dense<0.000000e+00> : vector<8x8xf32>
    %26 = tpu.matmul %23, %24, %cst_19 {dimension_numbers = #tpu.dot_dimension_numbers<[1], [1], [0], [0], [0, 0, 1, 0], [], []>} : vector<8x32xbf16>, vector<8x32xbf16>, vector<8x8xf32> -> vector<8x8xf32>
    %cst_20 = arith.constant 0.176776692 : f32
    %27 = vector.broadcast %cst_20 : f32 to vector<8x8xf32>
    %28 = arith.mulf %26, %27 : vector<8x8xf32>
    %29 = vector.broadcast %22 : vector<1x8xf32> to vector<8x8xf32>
    %30 = arith.addf %28, %29 : vector<8x8xf32>
    %cst_21 = arith.constant dense<0xFF800000> : vector<8xf32>
    %31 = vector.multi_reduction <maximumf>, %30, %cst_21 [1] : vector<8x8xf32> to vector<8xf32>
    %32 = vector.shape_cast %31 : vector<8xf32> to vector<8x1xf32>
    %33 = vector.broadcast %32 : vector<8x1xf32> to vector<8x8xf32>
    %34 = arith.subf %30, %33 : vector<8x8xf32>
    %35 = math.exp %34 : vector<8x8xf32>
    %cst_22 = arith.constant dense<0.000000e+00> : vector<8xf32>
    %36 = vector.multi_reduction <add>, %35, %cst_22 [1] : vector<8x8xf32> to vector<8xf32>
    %37 = vector.shape_cast %36 : vector<8xf32> to vector<8x1xf32>
    %38 = vector.broadcast %37 : vector<8x1xf32> to vector<8x8xf32>
    %39 = arith.divf %35, %38 : vector<8x8xf32>
    %40 = arith.truncf %39 : vector<8x8xf32> to vector<8x8xbf16>
    %cst_23 = arith.constant dense<0.000000e+00> : vector<8x32xf32>
    %41 = tpu.matmul %40, %25, %cst_23 {dimension_numbers = #tpu.dot_dimension_numbers<[1], [0], [0], [1], [0, 0, 1, 1], [], []>} : vector<8x8xbf16>, vector<8x32xbf16>, vector<8x32xf32> -> vector<8x32xf32>
    %42 = vector.extract_strided_slice %18 {offsets = [0, 32], sizes = [8, 32], strides = [1, 1]} : vector<8x128xbf16> to vector<8x32xbf16>
    %43 = vector.extract_strided_slice %19 {offsets = [0, 32], sizes = [8, 32], strides = [1, 1]} : vector<8x128xbf16> to vector<8x32xbf16>
    %44 = vector.extract_strided_slice %20 {offsets = [0, 32], sizes = [8, 32], strides = [1, 1]} : vector<8x128xbf16> to vector<8x32xbf16>
    %cst_24 = arith.constant dense<0.000000e+00> : vector<8x8xf32>
    %45 = tpu.matmul %42, %43, %cst_24 {dimension_numbers = #tpu.dot_dimension_numbers<[1], [1], [0], [0], [0, 0, 1, 0], [], []>} : vector<8x32xbf16>, vector<8x32xbf16>, vector<8x8xf32> -> vector<8x8xf32>
    %cst_25 = arith.constant 0.176776692 : f32
    %46 = vector.broadcast %cst_25 : f32 to vector<8x8xf32>
    %47 = arith.mulf %45, %46 : vector<8x8xf32>
    %48 = vector.broadcast %22 : vector<1x8xf32> to vector<8x8xf32>
    %49 = arith.addf %47, %48 : vector<8x8xf32>
    %cst_26 = arith.constant dense<0xFF800000> : vector<8xf32>
    %50 = vector.multi_reduction <maximumf>, %49, %cst_26 [1] : vector<8x8xf32> to vector<8xf32>
    %51 = vector.shape_cast %50 : vector<8xf32> to vector<8x1xf32>
    %52 = vector.broadcast %51 : vector<8x1xf32> to vector<8x8xf32>
    %53 = arith.subf %49, %52 : vector<8x8xf32>
    %54 = math.exp %53 : vector<8x8xf32>
    %cst_27 = arith.constant dense<0.000000e+00> : vector<8xf32>
    %55 = vector.multi_reduction <add>, %54, %cst_27 [1] : vector<8x8xf32> to vector<8xf32>
    %56 = vector.shape_cast %55 : vector<8xf32> to vector<8x1xf32>
    %57 = vector.broadcast %56 : vector<8x1xf32> to vector<8x8xf32>
    %58 = arith.divf %54, %57 : vector<8x8xf32>
    %59 = arith.truncf %58 : vector<8x8xf32> to vector<8x8xbf16>
    %cst_28 = arith.constant dense<0.000000e+00> : vector<8x32xf32>
    %60 = tpu.matmul %59, %44, %cst_28 {dimension_numbers = #tpu.dot_dimension_numbers<[1], [0], [0], [1], [0, 0, 1, 1], [], []>} : vector<8x8xbf16>, vector<8x32xbf16>, vector<8x32xf32> -> vector<8x32xf32>
    %61 = vector.extract_strided_slice %18 {offsets = [0, 64], sizes = [8, 32], strides = [1, 1]} : vector<8x128xbf16> to vector<8x32xbf16>
    %62 = vector.extract_strided_slice %19 {offsets = [0, 64], sizes = [8, 32], strides = [1, 1]} : vector<8x128xbf16> to vector<8x32xbf16>
    %63 = vector.extract_strided_slice %20 {offsets = [0, 64], sizes = [8, 32], strides = [1, 1]} : vector<8x128xbf16> to vector<8x32xbf16>
    %cst_29 = arith.constant dense<0.000000e+00> : vector<8x8xf32>
    %64 = tpu.matmul %61, %62, %cst_29 {dimension_numbers = #tpu.dot_dimension_numbers<[1], [1], [0], [0], [0, 0, 1, 0], [], []>} : vector<8x32xbf16>, vector<8x32xbf16>, vector<8x8xf32> -> vector<8x8xf32>
    %cst_30 = arith.constant 0.176776692 : f32
    %65 = vector.broadcast %cst_30 : f32 to vector<8x8xf32>
    %66 = arith.mulf %64, %65 : vector<8x8xf32>
    %67 = vector.broadcast %22 : vector<1x8xf32> to vector<8x8xf32>
    %68 = arith.addf %66, %67 : vector<8x8xf32>
    %cst_31 = arith.constant dense<0xFF800000> : vector<8xf32>
    %69 = vector.multi_reduction <maximumf>, %68, %cst_31 [1] : vector<8x8xf32> to vector<8xf32>
    %70 = vector.shape_cast %69 : vector<8xf32> to vector<8x1xf32>
    %71 = vector.broadcast %70 : vector<8x1xf32> to vector<8x8xf32>
    %72 = arith.subf %68, %71 : vector<8x8xf32>
    %73 = math.exp %72 : vector<8x8xf32>
    %cst_32 = arith.constant dense<0.000000e+00> : vector<8xf32>
    %74 = vector.multi_reduction <add>, %73, %cst_32 [1] : vector<8x8xf32> to vector<8xf32>
    %75 = vector.shape_cast %74 : vector<8xf32> to vector<8x1xf32>
    %76 = vector.broadcast %75 : vector<8x1xf32> to vector<8x8xf32>
    %77 = arith.divf %73, %76 : vector<8x8xf32>
    %78 = arith.truncf %77 : vector<8x8xf32> to vector<8x8xbf16>
    %cst_33 = arith.constant dense<0.000000e+00> : vector<8x32xf32>
    %79 = tpu.matmul %78, %63, %cst_33 {dimension_numbers = #tpu.dot_dimension_numbers<[1], [0], [0], [1], [0, 0, 1, 1], [], []>} : vector<8x8xbf16>, vector<8x32xbf16>, vector<8x32xf32> -> vector<8x32xf32>
    %80 = vector.extract_strided_slice %18 {offsets = [0, 96], sizes = [8, 32], strides = [1, 1]} : vector<8x128xbf16> to vector<8x32xbf16>
    %81 = vector.extract_strided_slice %19 {offsets = [0, 96], sizes = [8, 32], strides = [1, 1]} : vector<8x128xbf16> to vector<8x32xbf16>
    %82 = vector.extract_strided_slice %20 {offsets = [0, 96], sizes = [8, 32], strides = [1, 1]} : vector<8x128xbf16> to vector<8x32xbf16>
    %cst_34 = arith.constant dense<0.000000e+00> : vector<8x8xf32>
    %83 = tpu.matmul %80, %81, %cst_34 {dimension_numbers = #tpu.dot_dimension_numbers<[1], [1], [0], [0], [0, 0, 1, 0], [], []>} : vector<8x32xbf16>, vector<8x32xbf16>, vector<8x8xf32> -> vector<8x8xf32>
    %cst_35 = arith.constant 0.176776692 : f32
    %84 = vector.broadcast %cst_35 : f32 to vector<8x8xf32>
    %85 = arith.mulf %83, %84 : vector<8x8xf32>
    %86 = vector.broadcast %22 : vector<1x8xf32> to vector<8x8xf32>
    %87 = arith.addf %85, %86 : vector<8x8xf32>
    %cst_36 = arith.constant dense<0xFF800000> : vector<8xf32>
    %88 = vector.multi_reduction <maximumf>, %87, %cst_36 [1] : vector<8x8xf32> to vector<8xf32>
    %89 = vector.shape_cast %88 : vector<8xf32> to vector<8x1xf32>
    %90 = vector.broadcast %89 : vector<8x1xf32> to vector<8x8xf32>
    %91 = arith.subf %87, %90 : vector<8x8xf32>
    %92 = math.exp %91 : vector<8x8xf32>
    %cst_37 = arith.constant dense<0.000000e+00> : vector<8xf32>
    %93 = vector.multi_reduction <add>, %92, %cst_37 [1] : vector<8x8xf32> to vector<8xf32>
    %94 = vector.shape_cast %93 : vector<8xf32> to vector<8x1xf32>
    %95 = vector.broadcast %94 : vector<8x1xf32> to vector<8x8xf32>
    %96 = arith.divf %92, %95 : vector<8x8xf32>
    %97 = arith.truncf %96 : vector<8x8xf32> to vector<8x8xbf16>
    %cst_38 = arith.constant dense<0.000000e+00> : vector<8x32xf32>
    %98 = tpu.matmul %97, %82, %cst_38 {dimension_numbers = #tpu.dot_dimension_numbers<[1], [0], [0], [1], [0, 0, 1, 1], [], []>} : vector<8x8xbf16>, vector<8x32xbf16>, vector<8x32xf32> -> vector<8x32xf32>
    %99 = tpu.concatenate %41, %60, %79, %98 in 1 : vector<8x32xf32>, vector<8x32xf32>, vector<8x32xf32>, vector<8x32xf32> -> vector<8x128xf32>
    %100 = arith.truncf %99 : vector<8x128xf32> to vector<8x128xbf16>
    %c0_39 = arith.constant 0 : index
    %c0_40 = arith.constant 0 : index
    %101 = vector.load %arg9[%c0_39, %c0_40] : memref<128x128xbf16, #tpu.memory_space<vmem>>, vector<128x128xbf16>
    %cst_41 = arith.constant dense<0.000000e+00> : vector<8x128xf32>
    %102 = tpu.matmul %100, %101, %cst_41 {dimension_numbers = #tpu.dot_dimension_numbers<[1], [0], [0], [1], [0, 0, 1, 1], [], []>} : vector<8x128xbf16>, vector<128x128xbf16>, vector<8x128xf32> -> vector<8x128xf32>
    %c0_42 = arith.constant 0 : index
    %c0_43 = arith.constant 0 : index
    %103 = vector.load %arg10[%c0_42, %c0_43] : memref<1x128xf32, #tpu.memory_space<vmem>>, vector<1x128xf32>
    %104 = vector.broadcast %103 : vector<1x128xf32> to vector<8x128xf32>
    %105 = arith.addf %102, %104 : vector<8x128xf32>
    %106 = arith.addf %105, %1 : vector<8x128xf32>
    %cst_44 = arith.constant dense<0.000000e+00> : vector<8xf32>
    %107 = vector.multi_reduction <add>, %106, %cst_44 [1] : vector<8x128xf32> to vector<8xf32>
    %108 = vector.shape_cast %107 : vector<8xf32> to vector<8x1xf32>
    %cst_45 = arith.constant 1.280000e+02 : f32
    %109 = vector.broadcast %cst_45 : f32 to vector<8x1xf32>
    %110 = arith.divf %108, %109 : vector<8x1xf32>
    %111 = vector.broadcast %110 : vector<8x1xf32> to vector<8x128xf32>
    %112 = arith.subf %106, %111 : vector<8x128xf32>
    %113 = vector.broadcast %110 : vector<8x1xf32> to vector<8x128xf32>
    %114 = arith.subf %106, %113 : vector<8x128xf32>
    %115 = arith.mulf %112, %114 : vector<8x128xf32>
    %cst_46 = arith.constant dense<0.000000e+00> : vector<8xf32>
    %116 = vector.multi_reduction <add>, %115, %cst_46 [1] : vector<8x128xf32> to vector<8xf32>
    %117 = vector.shape_cast %116 : vector<8xf32> to vector<8x1xf32>
    %cst_47 = arith.constant 1.280000e+02 : f32
    %118 = vector.broadcast %cst_47 : f32 to vector<8x1xf32>
    %119 = arith.divf %117, %118 : vector<8x1xf32>
    %120 = vector.broadcast %110 : vector<8x1xf32> to vector<8x128xf32>
    %121 = arith.subf %106, %120 : vector<8x128xf32>
    %cst_48 = arith.constant 9.99999996E-13 : f32
    %122 = vector.broadcast %cst_48 : f32 to vector<8x1xf32>
    %123 = arith.addf %119, %122 : vector<8x1xf32>
    %124 = math.rsqrt %123 : vector<8x1xf32>
    %125 = vector.broadcast %124 : vector<8x1xf32> to vector<8x128xf32>
    %126 = arith.mulf %121, %125 : vector<8x128xf32>
    %c0_49 = arith.constant 0 : index
    %c0_50 = arith.constant 0 : index
    %127 = vector.load %arg11[%c0_49, %c0_50] : memref<1x128xf32, #tpu.memory_space<vmem>>, vector<1x128xf32>
    %128 = vector.broadcast %127 : vector<1x128xf32> to vector<8x128xf32>
    %129 = arith.mulf %128, %126 : vector<8x128xf32>
    %c0_51 = arith.constant 0 : index
    %c0_52 = arith.constant 0 : index
    %130 = vector.load %arg12[%c0_51, %c0_52] : memref<1x128xf32, #tpu.memory_space<vmem>>, vector<1x128xf32>
    %131 = vector.broadcast %130 : vector<1x128xf32> to vector<8x128xf32>
    %132 = arith.addf %129, %131 : vector<8x128xf32>
    %c0_53 = arith.constant 0 : index
    %c0_54 = arith.constant 0 : index
    %c0_55 = arith.constant 0 : index
    %133 = vector.load %arg13[%c0_53, %c0_54, %c0_55] : memref<1x8x128xf32, #tpu.memory_space<vmem>>, vector<1x8x128xf32>
    %134 = vector.shape_cast %133 : vector<1x8x128xf32> to vector<8x128xf32>
    %135 = vector.shape_cast %132 : vector<8x128xf32> to vector<1x8x128xf32>
    tpu.vector_store %arg13[%c0_53, %c0_54, %c0_55], %135 {strides = array<i32>} : memref<1x8x128xf32, #tpu.memory_space<vmem>>, vector<1x8x128xf32>,
    return
  }
  func.func @transform_0(%arg0: i32) -> (i32, i32, i32) {
    %c0_i32 = arith.constant 0 : i32
    %c0_i32_0 = arith.constant 0 : i32
    %c0_i32_1 = arith.constant 0 : i32
    return %arg0, %c0_i32, %c0_i32_0 : i32, i32, i32
  }
  func.func @transform_1(%arg0: i32) -> (i32, i32, i32) {
    %c0_i32 = arith.constant 0 : i32
    %c0_i32_0 = arith.constant 0 : i32
    %c0_i32_1 = arith.constant 0 : i32
    return %arg0, %c0_i32, %c0_i32_0 : i32, i32, i32
  }
  func.func @transform_2(%arg0: i32) -> (i32, i32) {
    %c0_i32 = arith.constant 0 : i32
    %c0_i32_0 = arith.constant 0 : i32
    %c0_i32_1 = arith.constant 0 : i32
    return %c0_i32, %c0_i32_0 : i32, i32
  }
  func.func @transform_3(%arg0: i32) -> (i32, i32) {
    %c0_i32 = arith.constant 0 : i32
    %c0_i32_0 = arith.constant 0 : i32
    %c0_i32_1 = arith.constant 0 : i32
    return %c0_i32, %c0_i32_0 : i32, i32
  }
  func.func @transform_4(%arg0: i32) -> (i32, i32) {
    %c0_i32 = arith.constant 0 : i32
    %c0_i32_0 = arith.constant 0 : i32
    %c0_i32_1 = arith.constant 0 : i32
    return %c0_i32, %c0_i32_0 : i32, i32
  }
  func.func @transform_5(%arg0: i32) -> (i32, i32) {
    %c0_i32 = arith.constant 0 : i32
    %c0_i32_0 = arith.constant 0 : i32
    %c0_i32_1 = arith.constant 0 : i32
    return %c0_i32, %c0_i32_0 : i32, i32
  }
  func.func @transform_6(%arg0: i32) -> (i32, i32) {
    %c0_i32 = arith.constant 0 : i32
    %c0_i32_0 = arith.constant 0 : i32
    %c0_i32_1 = arith.constant 0 : i32
    return %c0_i32, %c0_i32_0 : i32, i32
  }
  func.func @transform_7(%arg0: i32) -> (i32, i32) {
    %c0_i32 = arith.constant 0 : i32
    %c0_i32_0 = arith.constant 0 : i32
    %c0_i32_1 = arith.constant 0 : i32
    return %c0_i32, %c0_i32_0 : i32, i32
  }
  func.func @transform_8(%arg0: i32) -> (i32, i32) {
    %c0_i32 = arith.constant 0 : i32
    %c0_i32_0 = arith.constant 0 : i32
    %c0_i32_1 = arith.constant 0 : i32
    return %c0_i32, %c0_i32_0 : i32, i32
  }
  func.func @transform_9(%arg0: i32) -> (i32, i32) {
    %c0_i32 = arith.constant 0 : i32
    %c0_i32_0 = arith.constant 0 : i32
    %c0_i32_1 = arith.constant 0 : i32
    return %c0_i32, %c0_i32_0 : i32, i32
  }
  func.func @transform_10(%arg0: i32) -> (i32, i32) {
    %c0_i32 = arith.constant 0 : i32
    %c0_i32_0 = arith.constant 0 : i32
    %c0_i32_1 = arith.constant 0 : i32
    return %c0_i32, %c0_i32_0 : i32, i32
  }
  func.func @transform_11(%arg0: i32) -> (i32, i32) {
    %c0_i32 = arith.constant 0 : i32
    %c0_i32_0 = arith.constant 0 : i32
    %c0_i32_1 = arith.constant 0 : i32
    return %c0_i32, %c0_i32_0 : i32, i32
  }
  func.func @transform_12(%arg0: i32) -> (i32, i32, i32) {
    %c0_i32 = arith.constant 0 : i32
    %c0_i32_0 = arith.constant 0 : i32
    %c0_i32_1 = arith.constant 0 : i32
    return %arg0, %c0_i32, %c0_i32_0 : i32, i32, i32
  }
}

</mosaic_0001>

<llo_original>
// kernel: tpu_custom_call.1
$region0: #{tpu_custom_call.1}
  #allocation0 [shape = 'u32[]', space=smem, size = 0x4, offset = 0x4, fixed_abs, tag = 'smem constant byte address 0x4 - core index']
  #allocation1 [shape = 'u32[144,128]{1,0:T(1,128)}', space=vmem, size = 0x12000, scoped, tag = 'internal scratch']
  %s0 = inlined_call_operand.hbm [shape: f32[2,8,128], index: 0, kind: input, shape index: {}]
  %s1 = inlined_call_operand.vmem [shape: f32[2,1,8], index: 1, kind: input, shape index: {}]
  %s2 = inlined_call_operand.hbm [shape: bf16[128,128], index: 2, kind: input, shape index: {}]
  %s3 = inlined_call_operand.vmem [shape: f32[1,128], index: 3, kind: input, shape index: {}]
  %s4 = inlined_call_operand.hbm [shape: bf16[128,128], index: 4, kind: input, shape index: {}]
  %s5 = inlined_call_operand.vmem [shape: f32[1,128], index: 5, kind: input, shape index: {}]
  %s6 = inlined_call_operand.hbm [shape: bf16[128,128], index: 6, kind: input, shape index: {}]
  %s7 = inlined_call_operand.vmem [shape: f32[1,128], index: 7, kind: input, shape index: {}]
  %s8 = inlined_call_operand.hbm [shape: bf16[128,128], index: 8, kind: input, shape index: {}]
  %s9 = inlined_call_operand.vmem [shape: f32[1,128], index: 9, kind: input, shape index: {}]
  %s10 = inlined_call_operand.vmem [shape: f32[1,128], index: 10, kind: input, shape index: {}]
  %s11 = inlined_call_operand.vmem [shape: f32[1,128], index: 11, kind: input, shape index: {}]
  %s12 = inlined_call_operand.hbm [shape: f32[2,8,128], index: 12, kind: output, shape index: {}]
  %s13 = sld [smem:[#allocation0]]
  $region101: #{tpu_custom_call.1} parent=0
    _
  %s15 = ssub.s32 1, %s13
  %s16 = scalar_select 0, %s15, %s13
  $region1: #{tpu_custom_call.1} parent=0
    #allocation2 [shape = 'u8[8192]{0}', space=vmem, size = 0x2000, scoped, tag = 'input window, operand 0']
    #allocation3 [shape = 's32[2]{0}', space=sflag, size = 0x8, scoped, tag = 'scoped memory for tpu_custom_call.1']
    #allocation4 [shape = 's32[2]{0}', space=sflag, size = 0x8, scoped, tag = 'scoped memory for tpu_custom_call.1']
    #allocation5 [shape = 'u8[32768]{0}', space=vmem, size = 0x8000, scoped, tag = 'input window, operand 2, single buffered']
    #allocation6 [shape = 's32[1]{0}', space=sflag, size = 0x4, scoped, tag = 'scoped memory for tpu_custom_call.1']
    #allocation7 [shape = 'u8[32768]{0}', space=vmem, size = 0x8000, scoped, tag = 'input window, operand 4, single buffered']
    #allocation8 [shape = 'u8[32768]{0}', space=vmem, size = 0x8000, scoped, tag = 'input window, operand 6, single buffered']
    #allocation9 [shape = 's32[1]{0}', space=sflag, size = 0x4, scoped, tag = 'scoped memory for tpu_custom_call.1']
    #allocation10 [shape = 'u8[32768]{0}', space=vmem, size = 0x8000, scoped, tag = 'input window, operand 8, single buffered']
    #allocation11 [shape = 'u8[8192]{0}', space=vmem, size = 0x2000, scoped, tag = 'output window, operand 0']
    %17 = vsyncpa [#allocation3], 0
    %s18 = scalar_lea.sflag [#allocation3], 1
    %19 = vsyncpa %s18, 0
    %20 = vsyncpa [#allocation6], 0
    %21 = vsyncpa [#allocation9], 0
    %22 = vsyncpa [#allocation4], 0
    %s23 = scalar_lea.sflag [#allocation4], 1
    %24 = vsyncpa %s23, 0
    loop: start=0, step=1, limit=4
    $region2: #{tpu_custom_call.1} parent=1 // loop_pre_header
      _
    $region3: #{tpu_custom_call.1} parent=1 // loop_header
      %s26 = sphi 0, %s30
      %p27 = scmp.ge.s32.totalorder %s26, 4
      %s36 = sphi 0, %s38
      %s39 = sphi 0, %s36
      %s40 = sphi 0, %s39
      %s56 = sphi 0, %s40
      %s62 = sphi 0, %s64
      %s65 = sphi 0, %s62
      %s66 = sphi 0, %s65
      %s82 = sphi 0, %s66
      %s86 = sphi 0, %s86
      %s88 = sphi 0, %s86
      %s89 = sphi 0, %s88
      %s103 = sphi 0, %s89
      %s107 = sphi 0, %s107
      %s109 = sphi 0, %s107
      %s110 = sphi 0, %s109
      %s124 = sphi 0, %s110
      %s128 = sphi 0, %s128
      %s130 = sphi 0, %s128
      %s131 = sphi 0, %s130
      %s145 = sphi 0, %s131
      %s149 = sphi 0, %s149
      %s151 = sphi 0, %s149
      %s152 = sphi 0, %s151
      %s166 = sphi 0, %s152
      %s170 = sphi 0, %s170
      %s172 = sphi 0, %s170
      %s173 = sphi 0, %s172
      %s187 = sphi 0, %s173
      %s191 = sphi 0, %s191
      %s193 = sphi 0, %s191
      %s194 = sphi 0, %s193
      %s208 = sphi 0, %s194
      %s212 = sphi 0, %s212
      %s214 = sphi 0, %s212
      %s215 = sphi 0, %s214
      %s229 = sphi 0, %s215
      %s233 = sphi 0, %s233
      %s235 = sphi 0, %s233
      %s236 = sphi 0, %s235
      %s250 = sphi 0, %s236
      %s254 = sphi 0, %s254
      %s256 = sphi 0, %s254
      %s257 = sphi 0, %s256
      %s271 = sphi 0, %s257
      %s275 = sphi 0, %s275
      %s277 = sphi 0, %s275
      %s278 = sphi 0, %s277
      %s292 = sphi 0, %s278
      %s298 = sphi 0, %s300
      %s301 = sphi 0, %s298
      %s302 = sphi 0, %s301
      %s318 = sphi 0, %s302
    $region4: #{tpu_custom_call.1} parent=1 // loop_header_branch
      %29 = sbr.rel (%p27) target = $region8
    $region5: #{tpu_custom_call.1} parent=1 // loop_body
      %s31 = ssub.s32 %s26, 1
      %s32 = ssub.s32 %s26, 2
      %s33 = sadd.s32 %s26, 1
      %s34 = ssub.s32 %s26, %s33
      %p35 = scmp.eq.s32.totalorder %s34, 0
      %s37 = sadd.s32 %s36, 1
      %s38 = scalar_select %p35, %s36, %s37
      %p41 = pneg %p35
      %p42 = scmp.eq.s32.totalorder %s26, 1
      %p43 = por %p41, %p42
      %p44 = scmp.ne.s32.totalorder %s36, %s39
      %p45 = scmp.eq.s32.totalorder %s26, 0
      %p46 = por %p44, %p45
      %p47 = scmp.ne.s32.totalorder %s36, %s39
      %p48 = scmp.eq.s32.totalorder %s31, 1
      %p49 = por %p47, %p48
      %p50 = scmp.ne.s32.totalorder %s39, %s40
      %p51 = scmp.eq.s32.totalorder %s31, 0
      %p52 = por %p50, %p51
      %p53 = scmp.ne.s32.totalorder %s39, %s40
      %p54 = scmp.eq.s32.totalorder %s32, 1
      %p55 = por %p53, %p54
      %p57 = scmp.ne.s32.totalorder %s40, %s56
      %p58 = scmp.eq.s32.totalorder %s32, 0
      %p59 = por %p57, %p58
      %s60 = ssub.s32 %s26, %s33
      %p61 = scmp.eq.s32.totalorder %s60, 0
      %s63 = sadd.s32 %s62, 1
      %s64 = scalar_select %p61, %s62, %s63
      %p67 = pneg %p61
      %p68 = scmp.eq.s32.totalorder %s26, 1
      %p69 = por %p67, %p68
      %p70 = scmp.ne.s32.totalorder %s62, %s65
      %p71 = scmp.eq.s32.totalorder %s26, 0
      %p72 = por %p70, %p71
      %p73 = scmp.ne.s32.totalorder %s62, %s65
      %p74 = scmp.eq.s32.totalorder %s31, 1
      %p75 = por %p73, %p74
      %p76 = scmp.ne.s32.totalorder %s65, %s66
      %p77 = scmp.eq.s32.totalorder %s31, 0
      %p78 = por %p76, %p77
      %p79 = scmp.ne.s32.totalorder %s65, %s66
      %p80 = scmp.eq.s32.totalorder %s32, 1
      %p81 = por %p79, %p80
      %p83 = scmp.ne.s32.totalorder %s66, %s82
      %p84 = scmp.eq.s32.totalorder %s32, 0
      %p85 = por %p83, %p84
      %s87 = sadd.s32 %s86, 1
      %p90 = scmp.eq.s32.totalorder %s26, 1
      %p91 = scmp.ne.s32.totalorder %s86, %s88
      %p92 = scmp.eq.s32.totalorder %s26, 0
      %p93 = por %p91, %p92
      %p94 = scmp.ne.s32.totalorder %s86, %s88
      %p95 = scmp.eq.s32.totalorder %s31, 1
      %p96 = por %p94, %p95
      %p97 = scmp.ne.s32.totalorder %s88, %s89
      %p98 = scmp.eq.s32.totalorder %s31, 0
      %p99 = por %p97, %p98
      %p100 = scmp.ne.s32.totalorder %s88, %s89
      %p101 = scmp.eq.s32.totalorder %s32, 1
      %p102 = por %p100, %p101
      %p104 = scmp.ne.s32.totalorder %s89, %s103
      %p105 = scmp.eq.s32.totalorder %s32, 0
      %p106 = por %p104, %p105
      %s108 = sadd.s32 %s107, 1
      %p111 = scmp.eq.s32.totalorder %s26, 1
      %p112 = scmp.ne.s32.totalorder %s107, %s109
      %p113 = scmp.eq.s32.totalorder %s26, 0
      %p114 = por %p112, %p113
      %p115 = scmp.ne.s32.totalorder %s107, %s109
      %p116 = scmp.eq.s32.totalorder %s31, 1
      %p117 = por %p115, %p116
      %p118 = scmp.ne.s32.totalorder %s109, %s110
      %p119 = scmp.eq.s32.totalorder %s31, 0
      %p120 = por %p118, %p119
      %p121 = scmp.ne.s32.totalorder %s109, %s110
      %p122 = scmp.eq.s32.totalorder %s32, 1
      %p123 = por %p121, %p122
      %p125 = scmp.ne.s32.totalorder %s110, %s124
      %p126 = scmp.eq.s32.totalorder %s32, 0
      %p127 = por %p125, %p126
      %s129 = sadd.s32 %s128, 1
      %p132 = scmp.eq.s32.totalorder %s26, 1
      %p133 = scmp.ne.s32.totalorder %s128, %s130
      %p134 = scmp.eq.s32.totalorder %s26, 0
      %p135 = por %p133, %p134
      %p136 = scmp.ne.s32.totalorder %s128, %s130
      %p137 = scmp.eq.s32.totalorder %s31, 1
      %p138 = por %p136, %p137
      %p139 = scmp.ne.s32.totalorder %s130, %s131
      %p140 = scmp.eq.s32.totalorder %s31, 0
      %p141 = por %p139, %p140
      %p142 = scmp.ne.s32.totalorder %s130, %s131
      %p143 = scmp.eq.s32.totalorder %s32, 1
      %p144 = por %p142, %p143
      %p146 = scmp.ne.s32.totalorder %s131, %s145
      %p147 = scmp.eq.s32.totalorder %s32, 0
      %p148 = por %p146, %p147
      %s150 = sadd.s32 %s149, 1
      %p153 = scmp.eq.s32.totalorder %s26, 1
      %p154 = scmp.ne.s32.totalorder %s149, %s151
      %p155 = scmp.eq.s32.totalorder %s26, 0
      %p156 = por %p154, %p155
      %p157 = scmp.ne.s32.totalorder %s149, %s151
      %p158 = scmp.eq.s32.totalorder %s31, 1
      %p159 = por %p157, %p158
      %p160 = scmp.ne.s32.totalorder %s151, %s152
      %p161 = scmp.eq.s32.totalorder %s31, 0
      %p162 = por %p160, %p161
      %p163 = scmp.ne.s32.totalorder %s151, %s152
      %p164 = scmp.eq.s32.totalorder %s32, 1
      %p165 = por %p163, %p164
      %p167 = scmp.ne.s32.totalorder %s152, %s166
      %p168 = scmp.eq.s32.totalorder %s32, 0
      %p169 = por %p167, %p168
      %s171 = sadd.s32 %s170, 1
      %p174 = scmp.eq.s32.totalorder %s26, 1
      %p175 = scmp.ne.s32.totalorder %s170, %s172
      %p176 = scmp.eq.s32.totalorder %s26, 0
      %p177 = por %p175, %p176
      %p178 = scmp.ne.s32.totalorder %s170, %s172
      %p179 = scmp.eq.s32.totalorder %s31, 1
      %p180 = por %p178, %p179
      %p181 = scmp.ne.s32.totalorder %s172, %s173
      %p182 = scmp.eq.s32.totalorder %s31, 0
      %p183 = por %p181, %p182
      %p184 = scmp.ne.s32.totalorder %s172, %s173
      %p185 = scmp.eq.s32.totalorder %s32, 1
      %p186 = por %p184, %p185
      %p188 = scmp.ne.s32.totalorder %s173, %s187
      %p189 = scmp.eq.s32.totalorder %s32, 0
      %p190 = por %p188, %p189
      %s192 = sadd.s32 %s191, 1
      %p195 = scmp.eq.s32.totalorder %s26, 1
      %p196 = scmp.ne.s32.totalorder %s191, %s193
      %p197 = scmp.eq.s32.totalorder %s26, 0
      %p198 = por %p196, %p197
      %p199 = scmp.ne.s32.totalorder %s191, %s193
      %p200 = scmp.eq.s32.totalorder %s31, 1
      %p201 = por %p199, %p200
      %p202 = scmp.ne.s32.totalorder %s193, %s194
      %p203 = scmp.eq.s32.totalorder %s31, 0
      %p204 = por %p202, %p203
      %p205 = scmp.ne.s32.totalorder %s193, %s194
      %p206 = scmp.eq.s32.totalorder %s32, 1
      %p207 = por %p205, %p206
      %p209 = scmp.ne.s32.totalorder %s194, %s208
      %p210 = scmp.eq.s32.totalorder %s32, 0
      %p211 = por %p209, %p210
      %s213 = sadd.s32 %s212, 1
      %p216 = scmp.eq.s32.totalorder %s26, 1
      %p217 = scmp.ne.s32.totalorder %s212, %s214
      %p218 = scmp.eq.s32.totalorder %s26, 0
      %p219 = por %p217, %p218
      %p220 = scmp.ne.s32.totalorder %s212, %s214
      %p221 = scmp.eq.s32.totalorder %s31, 1
      %p222 = por %p220, %p221
      %p223 = scmp.ne.s32.totalorder %s214, %s215
      %p224 = scmp.eq.s32.totalorder %s31, 0
      %p225 = por %p223, %p224
      %p226 = scmp.ne.s32.totalorder %s214, %s215
      %p227 = scmp.eq.s32.totalorder %s32, 1
      %p228 = por %p226, %p227
      %p230 = scmp.ne.s32.totalorder %s215, %s229
      %p231 = scmp.eq.s32.totalorder %s32, 0
      %p232 = por %p230, %p231
      %s234 = sadd.s32 %s233, 1
      %p237 = scmp.eq.s32.totalorder %s26, 1
      %p238 = scmp.ne.s32.totalorder %s233, %s235
      %p239 = scmp.eq.s32.totalorder %s26, 0
      %p240 = por %p238, %p239
      %p241 = scmp.ne.s32.totalorder %s233, %s235
      %p242 = scmp.eq.s32.totalorder %s31, 1
      %p243 = por %p241, %p242
      %p244 = scmp.ne.s32.totalorder %s235, %s236
      %p245 = scmp.eq.s32.totalorder %s31, 0
      %p246 = por %p244, %p245
      %p247 = scmp.ne.s32.totalorder %s235, %s236
      %p248 = scmp.eq.s32.totalorder %s32, 1
      %p249 = por %p247, %p248
      %p251 = scmp.ne.s32.totalorder %s236, %s250
      %p252 = scmp.eq.s32.totalorder %s32, 0
      %p253 = por %p251, %p252
      %s255 = sadd.s32 %s254, 1
      %p258 = scmp.eq.s32.totalorder %s26, 1
      %p259 = scmp.ne.s32.totalorder %s254, %s256
      %p260 = scmp.eq.s32.totalorder %s26, 0
      %p261 = por %p259, %p260
      %p262 = scmp.ne.s32.totalorder %s254, %s256
      %p263 = scmp.eq.s32.totalorder %s31, 1
      %p264 = por %p262, %p263
      %p265 = scmp.ne.s32.totalorder %s256, %s257
      %p266 = scmp.eq.s32.totalorder %s31, 0
      %p267 = por %p265, %p266
      %p268 = scmp.ne.s32.totalorder %s256, %s257
      %p269 = scmp.eq.s32.totalorder %s32, 1
      %p270 = por %p268, %p269
      %p272 = scmp.ne.s32.totalorder %s257, %s271
      %p273 = scmp.eq.s32.totalorder %s32, 0
      %p274 = por %p272, %p273
      %s276 = sadd.s32 %s275, 1
      %p279 = scmp.eq.s32.totalorder %s26, 1
      %p280 = scmp.ne.s32.totalorder %s275, %s277
      %p281 = scmp.eq.s32.totalorder %s26, 0
      %p282 = por %p280, %p281
      %p283 = scmp.ne.s32.totalorder %s275, %s277
      %p284 = scmp.eq.s32.totalorder %s31, 1
      %p285 = por %p283, %p284
      %p286 = scmp.ne.s32.totalorder %s277, %s278
      %p287 = scmp.eq.s32.totalorder %s31, 0
      %p288 = por %p286, %p287
      %p289 = scmp.ne.s32.totalorder %s277, %s278
      %p290 = scmp.eq.s32.totalorder %s32, 1
      %p291 = por %p289, %p290
      %p293 = scmp.ne.s32.totalorder %s278, %s292
      %p294 = scmp.eq.s32.totalorder %s32, 0
      %p295 = por %p293, %p294
      %s296 = ssub.s32 %s26, %s33
      %p297 = scmp.eq.s32.totalorder %s296, 0
      %s299 = sadd.s32 %s298, 1
      %s300 = scalar_select %p297, %s298, %s299
      %p303 = pneg %p297
      %p304 = scmp.eq.s32.totalorder %s26, 1
      %p305 = por %p303, %p304
      %p306 = scmp.ne.s32.totalorder %s298, %s301
      %p307 = scmp.eq.s32.totalorder %s26, 0
      %p308 = por %p306, %p307
      %p309 = scmp.ne.s32.totalorder %s298, %s301
      %p310 = scmp.eq.s32.totalorder %s31, 1
      %p311 = por %p309, %p310
      %p312 = scmp.ne.s32.totalorder %s301, %s302
      %p313 = scmp.eq.s32.totalorder %s31, 0
      %p314 = por %p312, %p313
      %p315 = scmp.ne.s32.totalorder %s301, %s302
      %p316 = scmp.eq.s32.totalorder %s32, 1
      %p317 = por %p315, %p316
      %p319 = scmp.ne.s32.totalorder %s302, %s318
      %p320 = scmp.eq.s32.totalorder %s32, 0
      %p321 = por %p319, %p320
      %p322 = scmp.le.s32.totalorder 1, %s26
      %p323 = scmp.lt.s32.totalorder %s26, 3
      %p324 = pnand %p322, %p323
      %p325 = pneg %p324
      // Predicated region
      $region9: #{tpu_custom_call.1} parent=5 // pred_check
        _
      $region10: #{tpu_custom_call.1} parent=5 // pred_check_branch
        %327 = sbr.rel (%p324) target = $region12
      $region11: #{tpu_custom_call.1} parent=5 // pred_region
        %s328 = ssub.s32 %s26, 1
        // Predicated region
        $region13: #{tpu_custom_call.1} parent=11 // pred_check
          %p329 = pneg %p99
        $region14: #{tpu_custom_call.1} parent=11 // pred_check_branch
          %331 = sbr.rel (%p329) target = $region16
        $region15: #{tpu_custom_call.1} parent=11 // pred_region
          %s333 = ssub.s32 1024, 1024
          %334 = vsyncadd [#allocation6], %s333
          %s335 = sshll.u32 [#allocation5], 4
          %s336 = int_to_ptr.vmem [resolvable:$true] %s335
          %341 = dma.hbm_to_vmem [thread:$0]  %s2, 1024, %s336, [#allocation6], 64, 64, 4
        $region16: #{tpu_custom_call.1} parent=11 // pred_fallthru
          _
        // Predicated region
        $region17: #{tpu_custom_call.1} parent=11 // pred_check
          %p342 = pneg %p120
        $region18: #{tpu_custom_call.1} parent=11 // pred_check_branch
          %344 = sbr.rel (%p342) target = $region20
        $region19: #{tpu_custom_call.1} parent=11 // pred_region
          _
        $region20: #{tpu_custom_call.1} parent=11 // pred_fallthru
          _
        // Predicated region
        $region21: #{tpu_custom_call.1} parent=11 // pred_check
          %p345 = pneg %p141
        $region22: #{tpu_custom_call.1} parent=11 // pred_check_branch
          %347 = sbr.rel (%p345) target = $region24
        $region23: #{tpu_custom_call.1} parent=11 // pred_region
          %s349 = ssub.s32 1024, 1024
          %350 = vsyncadd [#allocation6], %s349
          %s351 = sshll.u32 [#allocation7], 4
          %s352 = int_to_ptr.vmem [resolvable:$true] %s351
          %357 = dma.hbm_to_vmem [thread:$0]  %s4, 1024, %s352, [#allocation6], 64, 64, 4
        $region24: #{tpu_custom_call.1} parent=11 // pred_fallthru
          _
        // Predicated region
        $region25: #{tpu_custom_call.1} parent=11 // pred_check
          %p358 = pneg %p162
        $region26: #{tpu_custom_call.1} parent=11 // pred_check_branch
          %360 = sbr.rel (%p358) target = $region28
        $region27: #{tpu_custom_call.1} parent=11 // pred_region
          _
        $region28: #{tpu_custom_call.1} parent=11 // pred_fallthru
          _
        // Predicated region
        $region29: #{tpu_custom_call.1} parent=11 // pred_check
          %p361 = pneg %p183
        $region30: #{tpu_custom_call.1} parent=11 // pred_check_branch
          %363 = sbr.rel (%p361) target = $region32
        $region31: #{tpu_custom_call.1} parent=11 // pred_region
          %s365 = ssub.s32 1024, 1024
          %366 = vsyncadd [#allocation9], %s365
          %s367 = sshll.u32 [#allocation8], 4
          %s368 = int_to_ptr.vmem [resolvable:$true] %s367
          %373 = dma.hbm_to_vmem [thread:$0]  %s6, 1024, %s368, [#allocation9], 64, 64, 4
        $region32: #{tpu_custom_call.1} parent=11 // pred_fallthru
          _
        // Predicated region
        $region33: #{tpu_custom_call.1} parent=11 // pred_check
          %p374 = pneg %p204
        $region34: #{tpu_custom_call.1} parent=11 // pred_check_branch
          %376 = sbr.rel (%p374) target = $region36
        $region35: #{tpu_custom_call.1} parent=11 // pred_region
          _
        $region36: #{tpu_custom_call.1} parent=11 // pred_fallthru
          _
        // Predicated region
        $region37: #{tpu_custom_call.1} parent=11 // pred_check
          %p377 = pneg %p225
        $region38: #{tpu_custom_call.1} parent=11 // pred_check_branch
          %379 = sbr.rel (%p377) target = $region40
        $region39: #{tpu_custom_call.1} parent=11 // pred_region
          %s381 = ssub.s32 1024, 1024
          %382 = vsyncadd [#allocation9], %s381
          %s383 = sshll.u32 [#allocation10], 4
          %s384 = int_to_ptr.vmem [resolvable:$true] %s383
          %389 = dma.hbm_to_vmem [thread:$0]  %s8, 1024, %s384, [#allocation9], 64, 64, 4
        $region40: #{tpu_custom_call.1} parent=11 // pred_fallthru
          _
        // Predicated region
        $region41: #{tpu_custom_call.1} parent=11 // pred_check
          %p390 = pneg %p246
        $region42: #{tpu_custom_call.1} parent=11 // pred_check_branch
          %392 = sbr.rel (%p390) target = $region44
        $region43: #{tpu_custom_call.1} parent=11 // pred_region
          _
        $region44: #{tpu_custom_call.1} parent=11 // pred_fallthru
          _
        // Predicated region
        $region45: #{tpu_custom_call.1} parent=11 // pred_check
          %p393 = pneg %p267
        $region46: #{tpu_custom_call.1} parent=11 // pred_check_branch
          %395 = sbr.rel (%p393) target = $region48
        $region47: #{tpu_custom_call.1} parent=11 // pred_region
          _
        $region48: #{tpu_custom_call.1} parent=11 // pred_fallthru
          _
        // Predicated region
        $region49: #{tpu_custom_call.1} parent=11 // pred_check
          %p396 = pneg %p288
        $region50: #{tpu_custom_call.1} parent=11 // pred_check_branch
          %398 = sbr.rel (%p396) target = $region52
        $region51: #{tpu_custom_call.1} parent=11 // pred_region
          _
        $region52: #{tpu_custom_call.1} parent=11 // pred_fallthru
          _
      $region12: #{tpu_custom_call.1} parent=5 // pred_fallthru
        _
      %p399 = scmp.lt.s32.totalorder %s26, 2
      // Predicated region
      $region53: #{tpu_custom_call.1} parent=5 // pred_check
        %p400 = pneg %p399
      $region54: #{tpu_custom_call.1} parent=5 // pred_check_branch
        %402 = sbr.rel (%p400) target = $region56
      $region55: #{tpu_custom_call.1} parent=5 // pred_region
        // Predicated region
        $region57: #{tpu_custom_call.1} parent=55 // pred_check
          %p403 = pneg %p46
        $region58: #{tpu_custom_call.1} parent=55 // pred_check_branch
          %405 = sbr.rel (%p403) target = $region60
        $region59: #{tpu_custom_call.1} parent=55 // pred_region
          %s406 = sand.u32 %s36, 1
          %s407 = scalar_lea.sflag [#allocation3], %s406
          %s408 = sand.u32 %s36, 1
          %s409 = smul.addr %s408, 8
          %s410 = scalar_lea.vmem [#allocation2], %s409
          %s412 = ssub.s32 128, 128
          %413 = vsyncadd %s407, %s412
          %s414 = smul.addr %s26, 128
          %s415 = scalar_lea.hbm %s0, %s414
          %s417 = sshll.u32 %s410, 4
          %s418 = int_to_ptr.vmem [resolvable:$true] %s417
          %420 = dma.hbm_to_vmem [thread:$0]  %s415, 128, %s418, %s407
        $region60: #{tpu_custom_call.1} parent=55 // pred_fallthru
          _
        // Predicated region
        $region61: #{tpu_custom_call.1} parent=55 // pred_check
          %p421 = pneg %p72
        $region62: #{tpu_custom_call.1} parent=55 // pred_check_branch
          %423 = sbr.rel (%p421) target = $region64
        $region63: #{tpu_custom_call.1} parent=55 // pred_region
          %p424 = scmp.lt.s32.totalorder %s26, 1
          %s425 = scalar_select %p424, %s26, 1
          %s426 = scalar_lea.vmem %s1, %s425
        $region64: #{tpu_custom_call.1} parent=55 // pred_fallthru
          _
      $region56: #{tpu_custom_call.1} parent=5 // pred_fallthru
        _
      %p427 = scmp.le.s32.totalorder 1, %s26
      %p428 = scmp.lt.s32.totalorder %s26, 3
      %p429 = pnand %p427, %p428
      %p430 = pneg %p429
      // Predicated region
      $region65: #{tpu_custom_call.1} parent=5 // pred_check
        _
      $region66: #{tpu_custom_call.1} parent=5 // pred_check_branch
        %432 = sbr.rel (%p429) target = $region68
      $region67: #{tpu_custom_call.1} parent=5 // pred_region
        %s433 = ssub.s32 %s26, 1
        %s434 = sand.u32 %s39, 1
        %s435 = scalar_lea.sflag [#allocation3], %s434
        %s436 = sand.u32 %s39, 1
        %s437 = smul.addr %s436, 8
        %s438 = scalar_lea.vmem [#allocation2], %s437
        // Predicated region
        $region69: #{tpu_custom_call.1} parent=67 // pred_check
          %p439 = pneg %p52
        $region70: #{tpu_custom_call.1} parent=67 // pred_check_branch
          %441 = sbr.rel (%p439) target = $region72
        $region71: #{tpu_custom_call.1} parent=67 // pred_region
          %442 = dma.done %s435, 128
        $region72: #{tpu_custom_call.1} parent=67 // pred_fallthru
          _
        // Predicated region
        $region73: #{tpu_custom_call.1} parent=67 // pred_check
          %p443 = pneg %p99
        $region74: #{tpu_custom_call.1} parent=67 // pred_check_branch
          %445 = sbr.rel (%p443) target = $region76
        $region75: #{tpu_custom_call.1} parent=67 // pred_region
          %446 = dma.done [#allocation6], 1024
        $region76: #{tpu_custom_call.1} parent=67 // pred_fallthru
          _
        // Predicated region
        $region77: #{tpu_custom_call.1} parent=67 // pred_check
          %p447 = pneg %p141
        $region78: #{tpu_custom_call.1} parent=67 // pred_check_branch
          %449 = sbr.rel (%p447) target = $region80
        $region79: #{tpu_custom_call.1} parent=67 // pred_region
          %450 = dma.done [#allocation6], 1024
        $region80: #{tpu_custom_call.1} parent=67 // pred_fallthru
          _
        // Predicated region
        $region81: #{tpu_custom_call.1} parent=67 // pred_check
          %p451 = pneg %p183
        $region82: #{tpu_custom_call.1} parent=67 // pred_check_branch
          %453 = sbr.rel (%p451) target = $region84
        $region83: #{tpu_custom_call.1} parent=67 // pred_region
          %454 = dma.done [#allocation9], 1024
        $region84: #{tpu_custom_call.1} parent=67 // pred_fallthru
          _
        // Predicated region
        $region85: #{tpu_custom_call.1} parent=67 // pred_check
          %p455 = pneg %p225
        $region86: #{tpu_custom_call.1} parent=67 // pred_check_branch
          %457 = sbr.rel (%p455) target = $region88
        $region87: #{tpu_custom_call.1} parent=67 // pred_region
          %458 = dma.done [#allocation9], 1024
        $region88: #{tpu_custom_call.1} parent=67 // pred_fallthru
          _
        %s459 = sand.u32 %s39, 1
        %s460 = scalar_lea.sflag [#allocation3], %s459
        %s461 = sand.u32 %s39, 1
        %s462 = smul.addr %s461, 8
        %s463 = scalar_lea.vmem [#allocation2], %s462
        %p464 = pneg %p52
        %p465 = pneg %p49
        %p466 = scmp.lt.s32.totalorder %s31, 1
        %s467 = scalar_select %p466, %s31, 1
        %s468 = scalar_lea.vmem %s1, %s467
        %p469 = pneg %p78
        %p470 = pneg %p75
        %p471 = pneg %p99
        %p472 = pneg %p96
        %p473 = pneg %p120
        %p474 = pneg %p117
        %p475 = pneg %p141
        %p476 = pneg %p138
        %p477 = pneg %p162
        %p478 = pneg %p159
        %p479 = pneg %p183
        %p480 = pneg %p180
        %p481 = pneg %p204
        %p482 = pneg %p201
        %p483 = pneg %p225
        %p484 = pneg %p222
        %p485 = pneg %p246
        %p486 = pneg %p243
        %p487 = pneg %p267
        %p488 = pneg %p264
        %p489 = pneg %p288
        %p490 = pneg %p285
        %p491 = pneg %p314
        %p492 = pneg %p311
        %s493 = sand.u32 %s301, 1
        %s494 = scalar_lea.sflag [#allocation4], %s493
        %s495 = sand.u32 %s301, 1
        %s496 = smul.addr %s495, 8
        %s497 = scalar_lea.vmem [#allocation11], %s496
        %p498 = scmp.lt.s32.totalorder %s31, 1
        %s499 = scalar_select %p498, %s31, 1
        %s500 = scalar_lea.vmem %s1, %s499
        %v502 = vld [vmem:[%s438] sm:$0xff]
        %v503 = vpack.c.bf16 %v502, %v502
        %v504 = vld [vmem:[#allocation5] sm:$0xf]
        %v505 = vld [vmem:[#allocation5 + $0x4] sm:$0xf]
        %v506 = vld [vmem:[#allocation5 + $0x8] sm:$0xf]
        %v507 = vld [vmem:[#allocation5 + $0xc] sm:$0xf]
        %v508 = vld [vmem:[#allocation5 + $0x10] sm:$0xf]
        %v509 = vld [vmem:[#allocation5 + $0x14] sm:$0xf]
        %v510 = vld [vmem:[#allocation5 + $0x18] sm:$0xf]
        %v511 = vld [vmem:[#allocation5 + $0x1c] sm:$0xf]
        %v512 = vld [vmem:[#allocation5 + $0x20] sm:$0xf]
        %v513 = vld [vmem:[#allocation5 + $0x24] sm:$0xf]
        %v514 = vld [vmem:[#allocation5 + $0x28] sm:$0xf]
        %v515 = vld [vmem:[#allocation5 + $0x2c] sm:$0xf]
        %v516 = vld [vmem:[#allocation5 + $0x30] sm:$0xf]
        %v517 = vld [vmem:[#allocation5 + $0x34] sm:$0xf]
        %v518 = vld [vmem:[#allocation5 + $0x38] sm:$0xf]
        %v519 = vld [vmem:[#allocation5 + $0x3c] sm:$0xf]
        %v520 = vld [vmem:[%s3] sm:$0x1]
        %v522 = vlaneseq
        %v523 = vshrl.u32 %v522, 7
        %v524 = vsub.s32 0, %v523
        %v525 = vrot.slane %v520, %v524
        %v543 = vunpack.c.l.b16 %v504
        %v544 = vunpack.c.l.b16 %v505
        %v545 = vunpack.c.l.b16 %v506
        %v546 = vunpack.c.l.b16 %v507
        %v547 = vunpack.c.l.b16 %v508
        %v548 = vunpack.c.l.b16 %v509
        %v549 = vunpack.c.l.b16 %v510
        %v550 = vunpack.c.l.b16 %v511
        %v551 = vunpack.c.l.b16 %v512
        %v552 = vunpack.c.l.b16 %v513
        %v553 = vunpack.c.l.b16 %v514
        %v554 = vunpack.c.l.b16 %v515
        %v555 = vunpack.c.l.b16 %v516
        %v556 = vunpack.c.l.b16 %v517
        %v557 = vunpack.c.l.b16 %v518
        %v558 = vunpack.c.l.b16 %v519
        %v559 = vpack.c.b16 %v544, %v543
        %v560 = vpack.c.b16 %v546, %v545
        %v561 = vpack.c.b16 %v548, %v547
        %v562 = vpack.c.b16 %v550, %v549
        %v563 = vpack.c.b16 %v552, %v551
        %v564 = vpack.c.b16 %v554, %v553
        %v565 = vpack.c.b16 %v556, %v555
        %v566 = vpack.c.b16 %v558, %v557
        %575 = vmatprep.subr.bf16.mxu0 0
        %576 = vmatpush1.bf16.msra.mxu0 %v559
        %577 = vmatprep.subr.bf16.mxu0 0
        %578 = vmatpush1.bf16.msra.mxu0 %v560
        %579 = vmatprep.subr.bf16.mxu0 0
        %580 = vmatpush1.bf16.msra.mxu0 %v561
        %581 = vmatprep.subr.bf16.mxu0 0
        %582 = vmatpush1.bf16.msra.mxu0 %v562
        %583 = vmatprep.subr.bf16.mxu0 0
        %584 = vmatpush1.bf16.msra.mxu0 %v563
        %585 = vmatprep.subr.bf16.mxu0 0
        %586 = vmatpush1.bf16.msra.mxu0 %v564
        %587 = vmatprep.subr.bf16.mxu0 0
        %588 = vmatpush1.bf16.msra.mxu0 %v565
        %589 = vmatprep.subr.bf16.mxu0 0
        %590 = vmatpush1.bf16.msra.mxu0 %v566
        %591 = vmatprep.subr.bf16.mxu0 0
        %592 = vmatpush1.bf16.msra.mxu0 0
        %593 = vmatprep.subr.bf16.mxu0 0
        %594 = vmatpush1.bf16.msra.mxu0 0
        %595 = vmatprep.subr.bf16.mxu0 0
        %596 = vmatpush1.bf16.msra.mxu0 0
        %597 = vmatprep.subr.bf16.mxu0 0
        %598 = vmatpush1.bf16.msra.mxu0 0
        %599 = vmatprep.subr.bf16.mxu0 0
        %600 = vmatpush1.bf16.msra.mxu0 0
        %601 = vmatprep.subr.bf16.mxu0 0
        %602 = vmatpush1.bf16.msra.mxu0 0
        %603 = vmatprep.subr.bf16.mxu0 0
        %604 = vmatpush1.bf16.msra.mxu0 0
        %605 = vmatprep.subr.bf16.mxu0 0
        %606 = vmatpush1.bf16.msra.mxu0 0
        %607 = vmatprep.mubr.bf16.mxu0 0
        %608 = vmatmul.mubr.bf16.gmra.mrb[0].mxu0 %v503
        %v609 = vpop.f32.mrb[0].mxu0
        %v610 = vadd.f32 %v525, %v609
        %v611 = vpop.f32.mrb[0].mxu0
        %v612 = vpop.f32.mrb[0].mxu0
        %v613 = vpop.f32.mrb[0].mxu0
        %614 = vdwg.mxu0
        %v615 = vld [vmem:[#allocation7] sm:$0xf]
        %v616 = vld [vmem:[#allocation7 + $0x4] sm:$0xf]
        %v617 = vld [vmem:[#allocation7 + $0x8] sm:$0xf]
        %v618 = vld [vmem:[#allocation7 + $0xc] sm:$0xf]
        %v619 = vld [vmem:[#allocation7 + $0x10] sm:$0xf]
        %v620 = vld [vmem:[#allocation7 + $0x14] sm:$0xf]
        %v621 = vld [vmem:[#allocation7 + $0x18] sm:$0xf]
        %v622 = vld [vmem:[#allocation7 + $0x1c] sm:$0xf]
        %v623 = vld [vmem:[#allocation7 + $0x20] sm:$0xf]
        %v624 = vld [vmem:[#allocation7 + $0x24] sm:$0xf]
        %v625 = vld [vmem:[#allocation7 + $0x28] sm:$0xf]
        %v626 = vld [vmem:[#allocation7 + $0x2c] sm:$0xf]
        %v627 = vld [vmem:[#allocation7 + $0x30] sm:$0xf]
        %v628 = vld [vmem:[#allocation7 + $0x34] sm:$0xf]
        %v629 = vld [vmem:[#allocation7 + $0x38] sm:$0xf]
        %v630 = vld [vmem:[#allocation7 + $0x3c] sm:$0xf]
        %v631 = vld [vmem:[%s5] sm:$0x1]
        %v633 = vlaneseq
        %v634 = vshrl.u32 %v633, 7
        %v635 = vsub.s32 0, %v634
        %v636 = vrot.slane %v631, %v635
        %v654 = vunpack.c.l.b16 %v615
        %v655 = vunpack.c.l.b16 %v616
        %v656 = vunpack.c.l.b16 %v617
        %v657 = vunpack.c.l.b16 %v618
        %v658 = vunpack.c.l.b16 %v619
        %v659 = vunpack.c.l.b16 %v620
        %v660 = vunpack.c.l.b16 %v621
        %v661 = vunpack.c.l.b16 %v622
        %v662 = vunpack.c.l.b16 %v623
        %v663 = vunpack.c.l.b16 %v624
        %v664 = vunpack.c.l.b16 %v625
        %v665 = vunpack.c.l.b16 %v626
        %v666 = vunpack.c.l.b16 %v627
        %v667 = vunpack.c.l.b16 %v628
        %v668 = vunpack.c.l.b16 %v629
        %v669 = vunpack.c.l.b16 %v630
        %v670 = vpack.c.b16 %v655, %v654
        %v671 = vpack.c.b16 %v657, %v656
        %v672 = vpack.c.b16 %v659, %v658
        %v673 = vpack.c.b16 %v661, %v660
        %v674 = vpack.c.b16 %v663, %v662
        %v675 = vpack.c.b16 %v665, %v664
        %v676 = vpack.c.b16 %v667, %v666
        %v677 = vpack.c.b16 %v669, %v668
        %686 = vmatprep.subr.bf16.mxu0 0
        %687 = vmatpush1.bf16.msra.mxu0 %v670
        %688 = vmatprep.subr.bf16.mxu0 0
        %689 = vmatpush1.bf16.msra.mxu0 %v671
        %690 = vmatprep.subr.bf16.mxu0 0
        %691 = vmatpush1.bf16.msra.mxu0 %v672
        %692 = vmatprep.subr.bf16.mxu0 0
        %693 = vmatpush1.bf16.msra.mxu0 %v673
        %694 = vmatprep.subr.bf16.mxu0 0
        %695 = vmatpush1.bf16.msra.mxu0 %v674
        %696 = vmatprep.subr.bf16.mxu0 0
        %697 = vmatpush1.bf16.msra.mxu0 %v675
        %698 = vmatprep.subr.bf16.mxu0 0
        %699 = vmatpush1.bf16.msra.mxu0 %v676
        %700 = vmatprep.subr.bf16.mxu0 0
        %701 = vmatpush1.bf16.msra.mxu0 %v677
        %702 = vmatprep.subr.bf16.mxu0 0
        %703 = vmatpush1.bf16.msra.mxu0 0
        %704 = vmatprep.subr.bf16.mxu0 0
        %705 = vmatpush1.bf16.msra.mxu0 0
        %706 = vmatprep.subr.bf16.mxu0 0
        %707 = vmatpush1.bf16.msra.mxu0 0
        %708 = vmatprep.subr.bf16.mxu0 0
        %709 = vmatpush1.bf16.msra.mxu0 0
        %710 = vmatprep.subr.bf16.mxu0 0
        %711 = vmatpush1.bf16.msra.mxu0 0
        %712 = vmatprep.subr.bf16.mxu0 0
        %713 = vmatpush1.bf16.msra.mxu0 0
        %714 = vmatprep.subr.bf16.mxu0 0
        %715 = vmatpush1.bf16.msra.mxu0 0
        %716 = vmatprep.subr.bf16.mxu0 0
        %717 = vmatpush1.bf16.msra.mxu0 0
        %718 = vmatprep.mubr.bf16.mxu0 0
        %719 = vmatmul.mubr.bf16.gmra.mrb[0].mxu0 %v503
        %v720 = vpop.f32.mrb[0].mxu0
        %v721 = vadd.f32 %v636, %v720
        %v722 = vpop.f32.mrb[0].mxu0
        %v723 = vpop.f32.mrb[0].mxu0
        %v724 = vpop.f32.mrb[0].mxu0
        %725 = vdwg.mxu0
        %v726 = vld [vmem:[#allocation8] sm:$0xf]
        %v727 = vld [vmem:[#allocation8 + $0x4] sm:$0xf]
        %v728 = vld [vmem:[#allocation8 + $0x8] sm:$0xf]
        %v729 = vld [vmem:[#allocation8 + $0xc] sm:$0xf]
        %v730 = vld [vmem:[#allocation8 + $0x10] sm:$0xf]
        %v731 = vld [vmem:[#allocation8 + $0x14] sm:$0xf]
        %v732 = vld [vmem:[#allocation8 + $0x18] sm:$0xf]
        %v733 = vld [vmem:[#allocation8 + $0x1c] sm:$0xf]
        %v734 = vld [vmem:[#allocation8 + $0x20] sm:$0xf]
        %v735 = vld [vmem:[#allocation8 + $0x24] sm:$0xf]
        %v736 = vld [vmem:[#allocation8 + $0x28] sm:$0xf]
        %v737 = vld [vmem:[#allocation8 + $0x2c] sm:$0xf]
        %v738 = vld [vmem:[#allocation8 + $0x30] sm:$0xf]
        %v739 = vld [vmem:[#allocation8 + $0x34] sm:$0xf]
        %v740 = vld [vmem:[#allocation8 + $0x38] sm:$0xf]
        %v741 = vld [vmem:[#allocation8 + $0x3c] sm:$0xf]
        %v742 = vld [vmem:[%s7] sm:$0x1]
        %v744 = vlaneseq
        %v745 = vshrl.u32 %v744, 7
        %v746 = vsub.s32 0, %v745
        %v747 = vrot.slane %v742, %v746
        %v765 = vunpack.c.l.b16 %v726
        %v766 = vunpack.c.l.b16 %v727
        %v767 = vunpack.c.l.b16 %v728
        %v768 = vunpack.c.l.b16 %v729
        %v769 = vunpack.c.l.b16 %v730
        %v770 = vunpack.c.l.b16 %v731
        %v771 = vunpack.c.l.b16 %v732
        %v772 = vunpack.c.l.b16 %v733
        %v773 = vunpack.c.l.b16 %v734
        %v774 = vunpack.c.l.b16 %v735
        %v775 = vunpack.c.l.b16 %v736
        %v776 = vunpack.c.l.b16 %v737
        %v777 = vunpack.c.l.b16 %v738
        %v778 = vunpack.c.l.b16 %v739
        %v779 = vunpack.c.l.b16 %v740
        %v780 = vunpack.c.l.b16 %v741
        %v781 = vpack.c.b16 %v766, %v765
        %v782 = vpack.c.b16 %v768, %v767
        %v783 = vpack.c.b16 %v770, %v769
        %v784 = vpack.c.b16 %v772, %v771
        %v785 = vpack.c.b16 %v774, %v773
        %v786 = vpack.c.b16 %v776, %v775
        %v787 = vpack.c.b16 %v778, %v777
        %v788 = vpack.c.b16 %v780, %v779
        %797 = vmatprep.subr.bf16.mxu0 0
        %798 = vmatpush1.bf16.msra.mxu0 %v781
        %799 = vmatprep.subr.bf16.mxu0 0
        %800 = vmatpush1.bf16.msra.mxu0 %v782
        %801 = vmatprep.subr.bf16.mxu0 0
        %802 = vmatpush1.bf16.msra.mxu0 %v783
        %803 = vmatprep.subr.bf16.mxu0 0
        %804 = vmatpush1.bf16.msra.mxu0 %v784
        %805 = vmatprep.subr.bf16.mxu0 0
        %806 = vmatpush1.bf16.msra.mxu0 %v785
        %807 = vmatprep.subr.bf16.mxu0 0
        %808 = vmatpush1.bf16.msra.mxu0 %v786
        %809 = vmatprep.subr.bf16.mxu0 0
        %810 = vmatpush1.bf16.msra.mxu0 %v787
        %811 = vmatprep.subr.bf16.mxu0 0
        %812 = vmatpush1.bf16.msra.mxu0 %v788
        %813 = vmatprep.subr.bf16.mxu0 0
        %814 = vmatpush1.bf16.msra.mxu0 0
        %815 = vmatprep.subr.bf16.mxu0 0
        %816 = vmatpush1.bf16.msra.mxu0 0
        %817 = vmatprep.subr.bf16.mxu0 0
        %818 = vmatpush1.bf16.msra.mxu0 0
        %819 = vmatprep.subr.bf16.mxu0 0
        %820 = vmatpush1.bf16.msra.mxu0 0
        %821 = vmatprep.subr.bf16.mxu0 0
        %822 = vmatpush1.bf16.msra.mxu0 0
        %823 = vmatprep.subr.bf16.mxu0 0
        %824 = vmatpush1.bf16.msra.mxu0 0
        %825 = vmatprep.subr.bf16.mxu0 0
        %826 = vmatpush1.bf16.msra.mxu0 0
        %827 = vmatprep.subr.bf16.mxu0 0
        %828 = vmatpush1.bf16.msra.mxu0 0
        %829 = vmatprep.mubr.bf16.mxu0 0
        %830 = vmatmul.mubr.bf16.gmra.mrb[0].mxu0 %v503
        %v831 = vpop.f32.mrb[0].mxu0
        %v832 = vadd.f32 %v747, %v831
        %v833 = vpop.f32.mrb[0].mxu0
        %v834 = vpop.f32.mrb[0].mxu0
        %v835 = vpop.f32.mrb[0].mxu0
        %836 = vdwg.mxu0
        %v837 = vpack.c.bf16 %v610, %v610
        %v838 = vpack.c.bf16 %v721, %v721
        %v839 = vpack.c.bf16 %v832, %v832
        %v840 = vld [vmem:[%s500] sm:$0x1]
        %vm841 = vcmask 261120
        %v843 = vsel %vm841, %v837, 0
        %v846 = vsel %vm841, %v838, 0
        %848 = vmatprep.subr.bf16.mxu0 0
        %849 = vmatpush1.bf16.xpose.msra.mxu0 %v846
        %850 = vmatprep.subr.bf16.mxu0 0
        %851 = vmatpush1.bf16.xpose.msra.mxu0 0
        %852 = vmatprep.subr.bf16.mxu0 0
        %853 = vmatpush1.bf16.xpose.msra.mxu0 0
        %854 = vmatprep.subr.bf16.mxu0 0
        %855 = vmatpush1.bf16.xpose.msra.mxu0 0
        %856 = vmatprep.subr.bf16.mxu0 0
        %857 = vmatpush1.bf16.xpose.msra.mxu0 0
        %858 = vmatprep.subr.bf16.mxu0 0
        %859 = vmatpush1.bf16.xpose.msra.mxu0 0
        %860 = vmatprep.subr.bf16.mxu0 0
        %861 = vmatpush1.bf16.xpose.msra.mxu0 0
        %862 = vmatprep.subr.bf16.mxu0 0
        %863 = vmatpush1.bf16.xpose.msra.mxu0 0
        %864 = vmatprep.subr.bf16.mxu0 0
        %865 = vmatpush1.bf16.xpose.msra.mxu0 0
        %866 = vmatprep.subr.bf16.mxu0 0
        %867 = vmatpush1.bf16.xpose.msra.mxu0 0
        %868 = vmatprep.subr.bf16.mxu0 0
        %869 = vmatpush1.bf16.xpose.msra.mxu0 0
        %870 = vmatprep.subr.bf16.mxu0 0
        %871 = vmatpush1.bf16.xpose.msra.mxu0 0
        %872 = vmatprep.subr.bf16.mxu0 0
        %873 = vmatpush1.bf16.xpose.msra.mxu0 0
        %874 = vmatprep.subr.bf16.mxu0 0
        %875 = vmatpush1.bf16.xpose.msra.mxu0 0
        %876 = vmatprep.subr.bf16.mxu0 0
        %877 = vmatpush1.bf16.xpose.msra.mxu0 0
        %878 = vmatprep.subr.bf16.mxu0 0
        %879 = vmatpush1.bf16.xpose.msra.mxu0 0
        %880 = vmatprep.mubr.bf16.mxu0 0
        %881 = vmatmul.mubr.bf16.gmra.mrb[0].mxu0 %v843
        %v882 = vpop.f32.mrb[0].mxu0
        %v883 = vadd.f32 0.0, %v882
        %v884 = vpop.f32.mrb[0].mxu0
        %v885 = vpop.f32.mrb[0].mxu0
        %v886 = vpop.f32.mrb[0].mxu0
        %887 = vdwg.mxu0
        %v888 = vmul.f32 %v883, 0.17677669
        %v890 = vlaneseq
        %v891 = vshrl.u32 %v890, 7
        %v892 = vsub.s32 0, %v891
        %v893 = vrot.slane %v840, %v892
        %v895 = vadd.f32 %v888, %v893
        %vm896 = vcmask 64512
        %v897 = vsel %vm896, %v895, -inf
        %898 = vmax.xlane.f32.xlu0 %v897
        %v899 = vpop.xlane.xlu0 %898
        %v900 = vsub.f32 %v895, %v899
        %v901 = vmul.f32 %v900, 1.442695
        %v902 = vpow.pop %v901
        %v903 = vsel %vm896, %v902, 0.0
        %904 = vadd.xlane.f32.xlu0 %v903
        %v905 = vpop.xlane.xlu0 %904
        %v906 = vrcp.pop %v905
        %v907 = vmul.f32 %v902, %v906
        %v908 = vpack.c.bf16 %v907, %v907
        %v910 = vsel %vm896, %v908, 0
        %vm912 = vcmask 1043456
        %v914 = vsel %vm912, %v839, 0
        %916 = vmatprep.subr.bf16.mxu0 0
        %917 = vmatpush1.bf16.msra.mxu0 %v914
        %918 = vmatprep.subr.bf16.mxu0 0
        %919 = vmatpush1.bf16.msra.mxu0 0
        %920 = vmatprep.subr.bf16.mxu0 0
        %921 = vmatpush1.bf16.msra.mxu0 0
        %922 = vmatprep.subr.bf16.mxu0 0
        %923 = vmatpush1.bf16.msra.mxu0 0
        %924 = vmatprep.subr.bf16.mxu0 0
        %925 = vmatpush1.bf16.msra.mxu0 0
        %926 = vmatprep.subr.bf16.mxu0 0
        %927 = vmatpush1.bf16.msra.mxu0 0
        %928 = vmatprep.subr.bf16.mxu0 0
        %929 = vmatpush1.bf16.msra.mxu0 0
        %930 = vmatprep.subr.bf16.mxu0 0
        %931 = vmatpush1.bf16.msra.mxu0 0
        %932 = vmatprep.subr.bf16.mxu0 0
        %933 = vmatpush1.bf16.msra.mxu0 0
        %934 = vmatprep.subr.bf16.mxu0 0
        %935 = vmatpush1.bf16.msra.mxu0 0
        %936 = vmatprep.subr.bf16.mxu0 0
        %937 = vmatpush1.bf16.msra.mxu0 0
        %938 = vmatprep.subr.bf16.mxu0 0
        %939 = vmatpush1.bf16.msra.mxu0 0
        %940 = vmatprep.subr.bf16.mxu0 0
        %941 = vmatpush1.bf16.msra.mxu0 0
        %942 = vmatprep.subr.bf16.mxu0 0
        %943 = vmatpush1.bf16.msra.mxu0 0
        %944 = vmatprep.subr.bf16.mxu0 0
        %945 = vmatpush1.bf16.msra.mxu0 0
        %946 = vmatprep.subr.bf16.mxu0 0
        %947 = vmatpush1.bf16.msra.mxu0 0
        %948 = vmatprep.mubr.bf16.mxu0 0
        %949 = vmatmul.mubr.bf16.gmra.mrb[0].mxu0 %v910
        %v950 = vpop.f32.mrb[0].mxu0
        %v951 = vadd.f32 0.0, %v950
        %v952 = vpop.f32.mrb[0].mxu0
        %v953 = vpop.f32.mrb[0].mxu0
        %v954 = vpop.f32.mrb[0].mxu0
        %955 = vdwg.mxu0
        %957 = vrot.lane.b32.xlu0 %v837, 96
        %v958 = vpop.permute.xlu0 %957
        %960 = vrot.lane.b32.xlu0 %v838, 96
        %v961 = vpop.permute.xlu0 %960
        %v963 = vsel %vm841, %v958, 0
        %v966 = vsel %vm841, %v961, 0
        %968 = vmatprep.subr.bf16.mxu0 0
        %969 = vmatpush1.bf16.xpose.msra.mxu0 %v966
        %970 = vmatprep.subr.bf16.mxu0 0
        %971 = vmatpush1.bf16.xpose.msra.mxu0 0
        %972 = vmatprep.subr.bf16.mxu0 0
        %973 = vmatpush1.bf16.xpose.msra.mxu0 0
        %974 = vmatprep.subr.bf16.mxu0 0
        %975 = vmatpush1.bf16.xpose.msra.mxu0 0
        %976 = vmatprep.subr.bf16.mxu0 0
        %977 = vmatpush1.bf16.xpose.msra.mxu0 0
        %978 = vmatprep.subr.bf16.mxu0 0
        %979 = vmatpush1.bf16.xpose.msra.mxu0 0
        %980 = vmatprep.subr.bf16.mxu0 0
        %981 = vmatpush1.bf16.xpose.msra.mxu0 0
        %982 = vmatprep.subr.bf16.mxu0 0
        %983 = vmatpush1.bf16.xpose.msra.mxu0 0
        %984 = vmatprep.subr.bf16.mxu0 0
        %985 = vmatpush1.bf16.xpose.msra.mxu0 0
        %986 = vmatprep.subr.bf16.mxu0 0
        %987 = vmatpush1.bf16.xpose.msra.mxu0 0
        %988 = vmatprep.subr.bf16.mxu0 0
        %989 = vmatpush1.bf16.xpose.msra.mxu0 0
        %990 = vmatprep.subr.bf16.mxu0 0
        %991 = vmatpush1.bf16.xpose.msra.mxu0 0
        %992 = vmatprep.subr.bf16.mxu0 0
        %993 = vmatpush1.bf16.xpose.msra.mxu0 0
        %994 = vmatprep.subr.bf16.mxu0 0
        %995 = vmatpush1.bf16.xpose.msra.mxu0 0
        %996 = vmatprep.subr.bf16.mxu0 0
        %997 = vmatpush1.bf16.xpose.msra.mxu0 0
        %998 = vmatprep.subr.bf16.mxu0 0
        %999 = vmatpush1.bf16.xpose.msra.mxu0 0
        %1000 = vmatprep.mubr.bf16.mxu0 0
        %1001 = vmatmul.mubr.bf16.gmra.mrb[0].mxu0 %v963
        %v1002 = vpop.f32.mrb[0].mxu0
        %v1003 = vadd.f32 0.0, %v1002
        %v1004 = vpop.f32.mrb[0].mxu0
        %v1005 = vpop.f32.mrb[0].mxu0
        %v1006 = vpop.f32.mrb[0].mxu0
        %1007 = vdwg.mxu0
        %v1008 = vmul.f32 %v1003, 0.17677669
        %v1009 = vadd.f32 %v1008, %v893
        %v1010 = vsel %vm896, %v1009, -inf
        %1011 = vmax.xlane.f32.xlu0 %v1010
        %v1012 = vpop.xlane.xlu0 %1011
        %v1013 = vsub.f32 %v1009, %v1012
        %v1014 = vmul.f32 %v1013, 1.442695
        %v1015 = vpow.pop %v1014
        %v1016 = vsel %vm896, %v1015, 0.0
        %1017 = vadd.xlane.f32.xlu0 %v1016
        %v1018 = vpop.xlane.xlu0 %1017
        %v1019 = vrcp.pop %v1018
        %v1020 = vmul.f32 %v1015, %v1019
        %v1021 = vpack.c.bf16 %v1020, %v1020
        %1023 = vrot.lane.b32.xlu0 %v839, 96
        %v1024 = vpop.permute.xlu0 %1023
        %v1026 = vsel %vm896, %v1021, 0
        %v1029 = vsel %vm912, %v1024, 0
        %1031 = vmatprep.subr.bf16.mxu0 0
        %1032 = vmatpush1.bf16.msra.mxu0 %v1029
        %1033 = vmatprep.subr.bf16.mxu0 0
        %1034 = vmatpush1.bf16.msra.mxu0 0
        %1035 = vmatprep.subr.bf16.mxu0 0
        %1036 = vmatpush1.bf16.msra.mxu0 0
        %1037 = vmatprep.subr.bf16.mxu0 0
        %1038 = vmatpush1.bf16.msra.mxu0 0
        %1039 = vmatprep.subr.bf16.mxu0 0
        %1040 = vmatpush1.bf16.msra.mxu0 0
        %1041 = vmatprep.subr.bf16.mxu0 0
        %1042 = vmatpush1.bf16.msra.mxu0 0
        %1043 = vmatprep.subr.bf16.mxu0 0
        %1044 = vmatpush1.bf16.msra.mxu0 0
        %1045 = vmatprep.subr.bf16.mxu0 0
        %1046 = vmatpush1.bf16.msra.mxu0 0
        %1047 = vmatprep.subr.bf16.mxu0 0
        %1048 = vmatpush1.bf16.msra.mxu0 0
        %1049 = vmatprep.subr.bf16.mxu0 0
        %1050 = vmatpush1.bf16.msra.mxu0 0
        %1051 = vmatprep.subr.bf16.mxu0 0
        %1052 = vmatpush1.bf16.msra.mxu0 0
        %1053 = vmatprep.subr.bf16.mxu0 0
        %1054 = vmatpush1.bf16.msra.mxu0 0
        %1055 = vmatprep.subr.bf16.mxu0 0
        %1056 = vmatpush1.bf16.msra.mxu0 0
        %1057 = vmatprep.subr.bf16.mxu0 0
        %1058 = vmatpush1.bf16.msra.mxu0 0
        %1059 = vmatprep.subr.bf16.mxu0 0
        %1060 = vmatpush1.bf16.msra.mxu0 0
        %1061 = vmatprep.subr.bf16.mxu0 0
        %1062 = vmatpush1.bf16.msra.mxu0 0
        %1063 = vmatprep.mubr.bf16.mxu0 0
        %1064 = vmatmul.mubr.bf16.gmra.mrb[0].mxu0 %v1026
        %v1065 = vpop.f32.mrb[0].mxu0
        %v1066 = vadd.f32 0.0, %v1065
        %v1067 = vpop.f32.mrb[0].mxu0
        %v1068 = vpop.f32.mrb[0].mxu0
        %v1069 = vpop.f32.mrb[0].mxu0
        %1070 = vdwg.mxu0
        %1071 = vrot.lane.b32.xlu0 %v837, 64
        %v1072 = vpop.permute.xlu0 %1071
        %1073 = vrot.lane.b32.xlu0 %v838, 64
        %v1074 = vpop.permute.xlu0 %1073
        %v1076 = vsel %vm841, %v1072, 0
        %v1079 = vsel %vm841, %v1074, 0
        %1081 = vmatprep.subr.bf16.mxu0 0
        %1082 = vmatpush1.bf16.xpose.msra.mxu0 %v1079
        %1083 = vmatprep.subr.bf16.mxu0 0
        %1084 = vmatpush1.bf16.xpose.msra.mxu0 0
        %1085 = vmatprep.subr.bf16.mxu0 0
        %1086 = vmatpush1.bf16.xpose.msra.mxu0 0
        %1087 = vmatprep.subr.bf16.mxu0 0
        %1088 = vmatpush1.bf16.xpose.msra.mxu0 0
        %1089 = vmatprep.subr.bf16.mxu0 0
        %1090 = vmatpush1.bf16.xpose.msra.mxu0 0
        %1091 = vmatprep.subr.bf16.mxu0 0
        %1092 = vmatpush1.bf16.xpose.msra.mxu0 0
        %1093 = vmatprep.subr.bf16.mxu0 0
        %1094 = vmatpush1.bf16.xpose.msra.mxu0 0
        %1095 = vmatprep.subr.bf16.mxu0 0
        %1096 = vmatpush1.bf16.xpose.msra.mxu0 0
        %1097 = vmatprep.subr.bf16.mxu0 0
        %1098 = vmatpush1.bf16.xpose.msra.mxu0 0
        %1099 = vmatprep.subr.bf16.mxu0 0
        %1100 = vmatpush1.bf16.xpose.msra.mxu0 0
        %1101 = vmatprep.subr.bf16.mxu0 0
        %1102 = vmatpush1.bf16.xpose.msra.mxu0 0
        %1103 = vmatprep.subr.bf16.mxu0 0
        %1104 = vmatpush1.bf16.xpose.msra.mxu0 0
        %1105 = vmatprep.subr.bf16.mxu0 0
        %1106 = vmatpush1.bf16.xpose.msra.mxu0 0
        %1107 = vmatprep.subr.bf16.mxu0 0
        %1108 = vmatpush1.bf16.xpose.msra.mxu0 0
        %1109 = vmatprep.subr.bf16.mxu0 0
        %1110 = vmatpush1.bf16.xpose.msra.mxu0 0
        %1111 = vmatprep.subr.bf16.mxu0 0
        %1112 = vmatpush1.bf16.xpose.msra.mxu0 0
        %1113 = vmatprep.mubr.bf16.mxu0 0
        %1114 = vmatmul.mubr.bf16.gmra.mrb[0].mxu0 %v1076
        %v1115 = vpop.f32.mrb[0].mxu0
        %v1116 = vadd.f32 0.0, %v1115
        %v1117 = vpop.f32.mrb[0].mxu0
        %v1118 = vpop.f32.mrb[0].mxu0
        %v1119 = vpop.f32.mrb[0].mxu0
        %1120 = vdwg.mxu0
        %v1121 = vmul.f32 %v1116, 0.17677669
        %v1122 = vadd.f32 %v1121, %v893
        %v1123 = vsel %vm896, %v1122, -inf
        %1124 = vmax.xlane.f32.xlu0 %v1123
        %v1125 = vpop.xlane.xlu0 %1124
        %v1126 = vsub.f32 %v1122, %v1125
        %v1127 = vmul.f32 %v1126, 1.442695
        %v1128 = vpow.pop %v1127
        %v1129 = vsel %vm896, %v1128, 0.0
        %1130 = vadd.xlane.f32.xlu0 %v1129
        %v1131 = vpop.xlane.xlu0 %1130
        %v1132 = vrcp.pop %v1131
        %v1133 = vmul.f32 %v1128, %v1132
        %v1134 = vpack.c.bf16 %v1133, %v1133
        %1135 = vrot.lane.b32.xlu0 %v839, 64
        %v1136 = vpop.permute.xlu0 %1135
        %v1138 = vsel %vm896, %v1134, 0
        %v1141 = vsel %vm912, %v1136, 0
        %1143 = vmatprep.subr.bf16.mxu0 0
        %1144 = vmatpush1.bf16.msra.mxu0 %v1141
        %1145 = vmatprep.subr.bf16.mxu0 0
        %1146 = vmatpush1.bf16.msra.mxu0 0
        %1147 = vmatprep.subr.bf16.mxu0 0
        %1148 = vmatpush1.bf16.msra.mxu0 0
        %1149 = vmatprep.subr.bf16.mxu0 0
        %1150 = vmatpush1.bf16.msra.mxu0 0
        %1151 = vmatprep.subr.bf16.mxu0 0
        %1152 = vmatpush1.bf16.msra.mxu0 0
        %1153 = vmatprep.subr.bf16.mxu0 0
        %1154 = vmatpush1.bf16.msra.mxu0 0
        %1155 = vmatprep.subr.bf16.mxu0 0
        %1156 = vmatpush1.bf16.msra.mxu0 0
        %1157 = vmatprep.subr.bf16.mxu0 0
        %1158 = vmatpush1.bf16.msra.mxu0 0
        %1159 = vmatprep.subr.bf16.mxu0 0
        %1160 = vmatpush1.bf16.msra.mxu0 0
        %1161 = vmatprep.subr.bf16.mxu0 0
        %1162 = vmatpush1.bf16.msra.mxu0 0
        %1163 = vmatprep.subr.bf16.mxu0 0
        %1164 = vmatpush1.bf16.msra.mxu0 0
        %1165 = vmatprep.subr.bf16.mxu0 0
        %1166 = vmatpush1.bf16.msra.mxu0 0
        %1167 = vmatprep.subr.bf16.mxu0 0
        %1168 = vmatpush1.bf16.msra.mxu0 0
        %1169 = vmatprep.subr.bf16.mxu0 0
        %1170 = vmatpush1.bf16.msra.mxu0 0
        %1171 = vmatprep.subr.bf16.mxu0 0
        %1172 = vmatpush1.bf16.msra.mxu0 0
        %1173 = vmatprep.subr.bf16.mxu0 0
        %1174 = vmatpush1.bf16.msra.mxu0 0
        %1175 = vmatprep.mubr.bf16.mxu0 0
        %1176 = vmatmul.mubr.bf16.gmra.mrb[0].mxu0 %v1138
        %v1177 = vpop.f32.mrb[0].mxu0
        %v1178 = vadd.f32 0.0, %v1177
        %v1179 = vpop.f32.mrb[0].mxu0
        %v1180 = vpop.f32.mrb[0].mxu0
        %v1181 = vpop.f32.mrb[0].mxu0
        %1182 = vdwg.mxu0
        %1183 = vrot.lane.b32.xlu0 %v837, 32
        %v1184 = vpop.permute.xlu0 %1183
        %1185 = vrot.lane.b32.xlu0 %v838, 32
        %v1186 = vpop.permute.xlu0 %1185
        %v1188 = vsel %vm841, %v1184, 0
        %v1191 = vsel %vm841, %v1186, 0
        %1193 = vmatprep.subr.bf16.mxu0 0
        %1194 = vmatpush1.bf16.xpose.msra.mxu0 %v1191
        %1195 = vmatprep.subr.bf16.mxu0 0
        %1196 = vmatpush1.bf16.xpose.msra.mxu0 0
        %1197 = vmatprep.subr.bf16.mxu0 0
        %1198 = vmatpush1.bf16.xpose.msra.mxu0 0
        %1199 = vmatprep.subr.bf16.mxu0 0
        %1200 = vmatpush1.bf16.xpose.msra.mxu0 0
        %1201 = vmatprep.subr.bf16.mxu0 0
        %1202 = vmatpush1.bf16.xpose.msra.mxu0 0
        %1203 = vmatprep.subr.bf16.mxu0 0
        %1204 = vmatpush1.bf16.xpose.msra.mxu0 0
        %1205 = vmatprep.subr.bf16.mxu0 0
        %1206 = vmatpush1.bf16.xpose.msra.mxu0 0
        %1207 = vmatprep.subr.bf16.mxu0 0
        %1208 = vmatpush1.bf16.xpose.msra.mxu0 0
        %1209 = vmatprep.subr.bf16.mxu0 0
        %1210 = vmatpush1.bf16.xpose.msra.mxu0 0
        %1211 = vmatprep.subr.bf16.mxu0 0
        %1212 = vmatpush1.bf16.xpose.msra.mxu0 0
        %1213 = vmatprep.subr.bf16.mxu0 0
        %1214 = vmatpush1.bf16.xpose.msra.mxu0 0
        %1215 = vmatprep.subr.bf16.mxu0 0
        %1216 = vmatpush1.bf16.xpose.msra.mxu0 0
        %1217 = vmatprep.subr.bf16.mxu0 0
        %1218 = vmatpush1.bf16.xpose.msra.mxu0 0
        %1219 = vmatprep.subr.bf16.mxu0 0
        %1220 = vmatpush1.bf16.xpose.msra.mxu0 0
        %1221 = vmatprep.subr.bf16.mxu0 0
        %1222 = vmatpush1.bf16.xpose.msra.mxu0 0
        %1223 = vmatprep.subr.bf16.mxu0 0
        %1224 = vmatpush1.bf16.xpose.msra.mxu0 0
        %1225 = vmatprep.mubr.bf16.mxu0 0
        %1226 = vmatmul.mubr.bf16.gmra.mrb[0].mxu0 %v1188
        %v1227 = vpop.f32.mrb[0].mxu0
        %v1228 = vadd.f32 0.0, %v1227
        %v1229 = vpop.f32.mrb[0].mxu0
        %v1230 = vpop.f32.mrb[0].mxu0
        %v1231 = vpop.f32.mrb[0].mxu0
        %1232 = vdwg.mxu0
        %v1233 = vmul.f32 %v1228, 0.17677669
        %v1234 = vadd.f32 %v1233, %v893
        %v1235 = vsel %vm896, %v1234, -inf
        %1236 = vmax.xlane.f32.xlu0 %v1235
        %v1237 = vpop.xlane.xlu0 %1236
        %v1238 = vsub.f32 %v1234, %v1237
        %v1239 = vmul.f32 %v1238, 1.442695
        %v1240 = vpow.pop %v1239
        %v1241 = vsel %vm896, %v1240, 0.0
        %1242 = vadd.xlane.f32.xlu0 %v1241
        %v1243 = vpop.xlane.xlu0 %1242
        %v1244 = vrcp.pop %v1243
        %v1245 = vmul.f32 %v1240, %v1244
        %v1246 = vpack.c.bf16 %v1245, %v1245
        %1247 = vrot.lane.b32.xlu0 %v839, 32
        %v1248 = vpop.permute.xlu0 %1247
        %v1250 = vsel %vm896, %v1246, 0
        %v1253 = vsel %vm912, %v1248, 0
        %1255 = vmatprep.subr.bf16.mxu0 0
        %1256 = vmatpush1.bf16.msra.mxu0 %v1253
        %1257 = vmatprep.subr.bf16.mxu0 0
        %1258 = vmatpush1.bf16.msra.mxu0 0
        %1259 = vmatprep.subr.bf16.mxu0 0
        %1260 = vmatpush1.bf16.msra.mxu0 0
        %1261 = vmatprep.subr.bf16.mxu0 0
        %1262 = vmatpush1.bf16.msra.mxu0 0
        %1263 = vmatprep.subr.bf16.mxu0 0
        %1264 = vmatpush1.bf16.msra.mxu0 0
        %1265 = vmatprep.subr.bf16.mxu0 0
        %1266 = vmatpush1.bf16.msra.mxu0 0
        %1267 = vmatprep.subr.bf16.mxu0 0
        %1268 = vmatpush1.bf16.msra.mxu0 0
        %1269 = vmatprep.subr.bf16.mxu0 0
        %1270 = vmatpush1.bf16.msra.mxu0 0
        %1271 = vmatprep.subr.bf16.mxu0 0
        %1272 = vmatpush1.bf16.msra.mxu0 0
        %1273 = vmatprep.subr.bf16.mxu0 0
        %1274 = vmatpush1.bf16.msra.mxu0 0
        %1275 = vmatprep.subr.bf16.mxu0 0
        %1276 = vmatpush1.bf16.msra.mxu0 0
        %1277 = vmatprep.subr.bf16.mxu0 0
        %1278 = vmatpush1.bf16.msra.mxu0 0
        %1279 = vmatprep.subr.bf16.mxu0 0
        %1280 = vmatpush1.bf16.msra.mxu0 0
        %1281 = vmatprep.subr.bf16.mxu0 0
        %1282 = vmatpush1.bf16.msra.mxu0 0
        %1283 = vmatprep.subr.bf16.mxu0 0
        %1284 = vmatpush1.bf16.msra.mxu0 0
        %1285 = vmatprep.subr.bf16.mxu0 0
        %1286 = vmatpush1.bf16.msra.mxu0 0
        %1287 = vmatprep.mubr.bf16.mxu0 0
        %1288 = vmatmul.mubr.bf16.gmra.mrb[0].mxu0 %v1250
        %v1289 = vpop.f32.mrb[0].mxu0
        %v1290 = vadd.f32 0.0, %v1289
        %v1291 = vpop.f32.mrb[0].mxu0
        %v1292 = vpop.f32.mrb[0].mxu0
        %v1293 = vpop.f32.mrb[0].mxu0
        %1294 = vdwg.mxu0
        %1296 = vrot.lane.b32.xlu0 %v1066, 32
        %v1297 = vpop.permute.xlu0 %1296
        %1300 = vrot.lane.b32.xlu0 %v1178, 64
        %v1301 = vpop.permute.xlu0 %1300
        %1304 = vrot.lane.b32.xlu0 %v1290, 96
        %v1305 = vpop.permute.xlu0 %1304
        %v1307 = vsel %vm841, %v951, %v1297
        %vm1308 = vcmask 523264
        %v1309 = vsel %vm1308, %v1307, %v1301
        %vm1310 = vcmask 785408
        %v1311 = vsel %vm1310, %v1309, %v1305
        %v1312 = vpack.c.bf16 %v1311, %v1311
        %v1313 = vld [vmem:[#allocation10] sm:$0xf]
        %v1314 = vld [vmem:[#allocation10 + $0x4] sm:$0xf]
        %v1315 = vld [vmem:[#allocation10 + $0x8] sm:$0xf]
        %v1316 = vld [vmem:[#allocation10 + $0xc] sm:$0xf]
        %v1317 = vld [vmem:[#allocation10 + $0x10] sm:$0xf]
        %v1318 = vld [vmem:[#allocation10 + $0x14] sm:$0xf]
        %v1319 = vld [vmem:[#allocation10 + $0x18] sm:$0xf]
        %v1320 = vld [vmem:[#allocation10 + $0x1c] sm:$0xf]
        %v1321 = vld [vmem:[#allocation10 + $0x20] sm:$0xf]
        %v1322 = vld [vmem:[#allocation10 + $0x24] sm:$0xf]
        %v1323 = vld [vmem:[#allocation10 + $0x28] sm:$0xf]
        %v1324 = vld [vmem:[#allocation10 + $0x2c] sm:$0xf]
        %v1325 = vld [vmem:[#allocation10 + $0x30] sm:$0xf]
        %v1326 = vld [vmem:[#allocation10 + $0x34] sm:$0xf]
        %v1327 = vld [vmem:[#allocation10 + $0x38] sm:$0xf]
        %v1328 = vld [vmem:[#allocation10 + $0x3c] sm:$0xf]
        %v1329 = vld [vmem:[%s9] sm:$0x1]
        %v1331 = vlaneseq
        %v1332 = vshrl.u32 %v1331, 7
        %v1333 = vsub.s32 0, %v1332
        %v1334 = vrot.slane %v1329, %v1333
        %v1352 = vunpack.c.l.b16 %v1313
        %v1353 = vunpack.c.l.b16 %v1314
        %v1354 = vunpack.c.l.b16 %v1315
        %v1355 = vunpack.c.l.b16 %v1316
        %v1356 = vunpack.c.l.b16 %v1317
        %v1357 = vunpack.c.l.b16 %v1318
        %v1358 = vunpack.c.l.b16 %v1319
        %v1359 = vunpack.c.l.b16 %v1320
        %v1360 = vunpack.c.l.b16 %v1321
        %v1361 = vunpack.c.l.b16 %v1322
        %v1362 = vunpack.c.l.b16 %v1323
        %v1363 = vunpack.c.l.b16 %v1324
        %v1364 = vunpack.c.l.b16 %v1325
        %v1365 = vunpack.c.l.b16 %v1326
        %v1366 = vunpack.c.l.b16 %v1327
        %v1367 = vunpack.c.l.b16 %v1328
        %v1368 = vpack.c.b16 %v1353, %v1352
        %v1369 = vpack.c.b16 %v1355, %v1354
        %v1370 = vpack.c.b16 %v1357, %v1356
        %v1371 = vpack.c.b16 %v1359, %v1358
        %v1372 = vpack.c.b16 %v1361, %v1360
        %v1373 = vpack.c.b16 %v1363, %v1362
        %v1374 = vpack.c.b16 %v1365, %v1364
        %v1375 = vpack.c.b16 %v1367, %v1366
        %1384 = vmatprep.subr.bf16.mxu0 0
        %1385 = vmatpush1.bf16.msra.mxu0 %v1368
        %1386 = vmatprep.subr.bf16.mxu0 0
        %1387 = vmatpush1.bf16.msra.mxu0 %v1369
        %1388 = vmatprep.subr.bf16.mxu0 0
        %1389 = vmatpush1.bf16.msra.mxu0 %v1370
        %1390 = vmatprep.subr.bf16.mxu0 0
        %1391 = vmatpush1.bf16.msra.mxu0 %v1371
        %1392 = vmatprep.subr.bf16.mxu0 0
        %1393 = vmatpush1.bf16.msra.mxu0 %v1372
        %1394 = vmatprep.subr.bf16.mxu0 0
        %1395 = vmatpush1.bf16.msra.mxu0 %v1373
        %1396 = vmatprep.subr.bf16.mxu0 0
        %1397 = vmatpush1.bf16.msra.mxu0 %v1374
        %1398 = vmatprep.subr.bf16.mxu0 0
        %1399 = vmatpush1.bf16.msra.mxu0 %v1375
        %1400 = vmatprep.subr.bf16.mxu0 0
        %1401 = vmatpush1.bf16.msra.mxu0 0
        %1402 = vmatprep.subr.bf16.mxu0 0
        %1403 = vmatpush1.bf16.msra.mxu0 0
        %1404 = vmatprep.subr.bf16.mxu0 0
        %1405 = vmatpush1.bf16.msra.mxu0 0
        %1406 = vmatprep.subr.bf16.mxu0 0
        %1407 = vmatpush1.bf16.msra.mxu0 0
        %1408 = vmatprep.subr.bf16.mxu0 0
        %1409 = vmatpush1.bf16.msra.mxu0 0
        %1410 = vmatprep.subr.bf16.mxu0 0
        %1411 = vmatpush1.bf16.msra.mxu0 0
        %1412 = vmatprep.subr.bf16.mxu0 0
        %1413 = vmatpush1.bf16.msra.mxu0 0
        %1414 = vmatprep.subr.bf16.mxu0 0
        %1415 = vmatpush1.bf16.msra.mxu0 0
        %1416 = vmatprep.mubr.bf16.mxu0 0
        %1417 = vmatmul.mubr.bf16.gmra.mrb[0].mxu0 %v1312
        %v1418 = vpop.f32.mrb[0].mxu0
        %v1419 = vadd.f32 %v1334, %v1418
        %v1420 = vpop.f32.mrb[0].mxu0
        %v1421 = vpop.f32.mrb[0].mxu0
        %v1422 = vpop.f32.mrb[0].mxu0
        %1423 = vdwg.mxu0
        %v1424 = vadd.f32 %v1419, %v502
        %1425 = vadd.xlane.f32.xlu0 %v1424
        %v1426 = vpop.xlane.xlu0 %1425
        %v1427 = vrcp.pop 128.0
        %v1428 = vmul.f32 %v1426, %v1427
        %v1429 = vsub.f32 %v1424, %v1428
        %v1430 = vmul.f32 %v1429, %v1429
        %1431 = vadd.xlane.f32.xlu0 %v1430
        %v1432 = vpop.xlane.xlu0 %1431
        %v1433 = vmul.f32 %v1432, %v1427
        %v1434 = vadd.f32 %v1433, 1e-12
        %v1435 = vrsqrt.pop %v1434
        %v1436 = vmul.f32 %v1429, %v1435
        %v1437 = vld [vmem:[%s10] sm:$0x1]
        %v1439 = vlaneseq
        %v1440 = vshrl.u32 %v1439, 7
        %v1441 = vsub.s32 0, %v1440
        %v1442 = vrot.slane %v1437, %v1441
        %v1444 = vmul.f32 %v1442, %v1436
        %v1445 = vld [vmem:[%s11] sm:$0x1]
        %v1447 = vlaneseq
        %v1448 = vshrl.u32 %v1447, 7
        %v1449 = vsub.s32 0, %v1448
        %v1450 = vrot.slane %v1445, %v1449
        %v1452 = vadd.f32 %v1444, %v1450
        %1453 = vst [vmem:[%s497] sm:$0xff] %v1452
        %s1454 = sand.u32 %s301, 1
        %s1455 = scalar_lea.sflag [#allocation4], %s1454
        %s1456 = sand.u32 %s301, 1
        %s1457 = smul.addr %s1456, 8
        %s1458 = scalar_lea.vmem [#allocation11], %s1457
        // Predicated region
        $region89: #{tpu_custom_call.1} parent=67 // pred_check
          %p1459 = pneg %p311
        $region90: #{tpu_custom_call.1} parent=67 // pred_check_branch
          %1461 = sbr.rel (%p1459) target = $region92
        $region91: #{tpu_custom_call.1} parent=67 // pred_region
          %s1463 = ssub.s32 128, 128
          %1464 = vsyncadd %s1455, %s1463
          %s1465 = smul.addr %s31, 128
          %s1466 = scalar_lea.hbm %s12, %s1465
          %s1468 = sshll.u32 %s1458, 4
          %s1469 = int_to_ptr.vmem [resolvable:$true] %s1468
          %1471 = dma.vmem_to_hbm [thread:$0]  %s1469, 128, %s1466, %s1455
        $region92: #{tpu_custom_call.1} parent=67 // pred_fallthru
          _
      $region68: #{tpu_custom_call.1} parent=5 // pred_fallthru
        _
      %p1472 = scmp.le.s32.totalorder 2, %s26
      // Predicated region
      $region93: #{tpu_custom_call.1} parent=5 // pred_check
        %p1473 = pneg %p1472
      $region94: #{tpu_custom_call.1} parent=5 // pred_check_branch
        %1475 = sbr.rel (%p1473) target = $region96
      $region95: #{tpu_custom_call.1} parent=5 // pred_region
        %s1476 = ssub.s32 %s26, 2
        // Predicated region
        $region97: #{tpu_custom_call.1} parent=95 // pred_check
          %p1477 = pneg %p317
        $region98: #{tpu_custom_call.1} parent=95 // pred_check_branch
          %1479 = sbr.rel (%p1477) target = $region100
        $region99: #{tpu_custom_call.1} parent=95 // pred_region
          %s1480 = sand.u32 %s302, 1
          %s1481 = scalar_lea.sflag [#allocation4], %s1480
          %s1482 = sand.u32 %s302, 1
          %s1483 = smul.addr %s1482, 8
          %s1484 = scalar_lea.vmem [#allocation11], %s1483
          %1485 = dma.done %s1481, 128
        $region100: #{tpu_custom_call.1} parent=95 // pred_fallthru
          _
      $region96: #{tpu_custom_call.1} parent=5 // pred_fallthru
        _
    $region6: #{tpu_custom_call.1} parent=1 // loop_footer
      %s30 = sadd.s32 1, %s26
    $region7: #{tpu_custom_call.1} parent=1 // loop_footer_branch
      %25 = sbr.rel target = $region3
    $region8: #{tpu_custom_call.1} parent=1 // loop_exit
      _
    %1486 = vsyncpa [#allocation3], 1
    %s1487 = scalar_lea.sflag [#allocation3], 1
    %1488 = vsyncpa %s1487, 1
    %1489 = vsyncpa [#allocation6], 1
    %1490 = vsyncpa [#allocation9], 1
    %1491 = vsyncpa [#allocation4], 1
    %s1492 = scalar_lea.sflag [#allocation4], 1
    %1493 = vsyncpa %s1492, 1

</llo_original>
